<compile_context>
chip_gen: v7x
topology: tpu7x:2x2x1
jax: 0.10.0
libtpu: 0.0.40
codegen_flags: <defaults>
</compile_context>

<pallas_src>
import jax
import jax.numpy as jnp
from jax.experimental import pallas as pl
from jax.experimental.pallas import tpu as pltpu


# ----------------------------------------------------------------------------
# BlockSpec helper: whole array as a single block (grid=(1,))
# ----------------------------------------------------------------------------
def _full_spec(shape):
    nd = len(shape)
    return pl.BlockSpec(shape, lambda i, _nd=nd: (0,) * _nd)


# ----------------------------------------------------------------------------
# Kernel A: fused CNN stack + GRU input projection
# ----------------------------------------------------------------------------
def make_cnn_gi_kernel(B, T):
    """Kernel over x laid out time-major & flattened: row = t*B + b."""
    TB = T * B
    inv_n = 1.0 / float(TB)

    def kernel(x_ref, w1, b1, w2, b2, g1, be1, w3, b3, w4, b4, g2, be2,
               wih, bih, o_ref):
        # boundary masks for the 'same'-padding conv taps (per sequence)
        row = jax.lax.broadcasted_iota(jnp.int32, (TB, 1), 0)
        keep_prev = row >= B          # t > 0
        keep_next = row < (TB - B)    # t < T - 1

        def conv_relu(x, w_ref, b_ref):
            # x: (TB, Cin) f32.  Build x[t-1], x[t+1] via sublane roll (XLU)
            # and zero the rows that wrapped across the sequence boundary.
            xp = jnp.where(keep_prev, pltpu.roll(x, B, axis=0), 0.0)
            xn = jnp.where(keep_next, pltpu.roll(x, TB - B, axis=0), 0.0)
            xcat = jnp.concatenate([xp, x, xn], axis=1).astype(jnp.bfloat16)
            y = jnp.dot(xcat, w_ref[...],
                        preferred_element_type=jnp.float32) + b_ref[...]
            return jnp.maximum(y, 0.0)

        def batchnorm(x, g_ref, be_ref):
            # BatchNorm1d (training mode): one-pass batch stats over (B, T).
            s = jnp.sum(x, axis=0, keepdims=True)
            sq = jnp.sum(x * x, axis=0, keepdims=True)
            mean = s * inv_n
            var = sq * inv_n - mean * mean
            inv = jax.lax.rsqrt(var + 1e-5)
            return (x - mean) * inv * g_ref[...] + be_ref[...]

        h = conv_relu(x_ref[...], w1, b1)          # (TB, 128)
        h = conv_relu(h, w2, b2)                   # (TB, 128)
        h = batchnorm(h, g1, be1)                  # (TB, 128)
        h = conv_relu(h, w3, b3)                   # (TB, 256)
        h = conv_relu(h, w4, b4)                   # (TB, 256)
        h = batchnorm(h, g2, be2)                  # (TB, 256)

        # hoisted GRU input projection (no recurrence): gi = h @ W_ih + b_ih
        gi = jnp.dot(h.astype(jnp.bfloat16), wih[...],
                     preferred_element_type=jnp.float32) + bih[...]
        o_ref[...] = gi                            # (TB, 3H) f32

    return kernel


def cnn_gru_input_proj(x_flat, p, *, B, T):
    """x_flat: (T*B, 128) time-major flattened embeddings. Returns (T*B, 3H)."""
    TB = T * B
    H3 = p["wih"].shape[1]
    args = (x_flat, p["w1"], p["b1"], p["w2"], p["b2"], p["g1"], p["be1"],
            p["w3"], p["b3"], p["w4"], p["b4"], p["g2"], p["be2"],
            p["wih"], p["bih"])
    # TODO(synk): for production B*T, add a leading "parallel" grid axis (v7x
    # dual-TC) with a two-pass BN; single block is right at these shapes.
    return pl.pallas_call(
        make_cnn_gi_kernel(B, T),
        out_shape=jax.ShapeDtypeStruct((TB, H3), jnp.float32),
        grid=(1,),
        in_specs=[_full_spec(a.shape) for a in args],
        out_specs=_full_spec((TB, H3)),
        compiler_params=pltpu.CompilerParams(
            dimension_semantics=("arbitrary",)),
    )(*args)


# ----------------------------------------------------------------------------
# Kernel B: GRU recurrence (in-kernel fori_loop) + last-step select + fc5 + fc6
# ----------------------------------------------------------------------------
def gru_fc_kernel(gi_ref, len_ref, whh_ref, bhh_ref,
                  w5_ref, b5_ref, w6_ref, b6_ref, o_ref):
    T, B, H3 = gi_ref.shape
    H = H3 // 3

    lens = len_ref[...]            # (B, 1) int32, loaded once
    whh = whh_ref[...]             # (H, 3H) bf16, resident across the loop
    bhh = bhh_ref[...]             # (1, 3H) f32

    def step(t, carry):
        h, last = carry
        gi_t = gi_ref[t]           # (B, 3H) f32, already includes b_ih
        gh = jnp.dot(h.astype(jnp.bfloat16), whh,
                     preferred_element_type=jnp.float32) + bhh
        r = jax.nn.sigmoid(gi_t[:, :H] + gh[:, :H])
        z = jax.nn.sigmoid(gi_t[:, H:2 * H] + gh[:, H:2 * H])
        n = jnp.tanh(gi_t[:, 2 * H:] + r * gh[:, 2 * H:])
        h_new = (1.0 - z) * n + z * h
        # output_all.gather(0, seq_len - 1)[0]
        last_new = jnp.where((lens - 1) == t, h_new, last)
        return h_new, last_new

    zeros = jnp.zeros((B, H), jnp.float32)
    _, last = jax.lax.fori_loop(0, T, step, (zeros, zeros))

    # fc5 + ReLU, fc6 + ReLU fused on the VMEM-resident hidden state
    y = jnp.dot(last.astype(jnp.bfloat16), w5_ref[...],
                preferred_element_type=jnp.float32) + b5_ref[...]
    y = jnp.maximum(y, 0.0)
    y = jnp.dot(y.astype(jnp.bfloat16), w6_ref[...],
                preferred_element_type=jnp.float32) + b6_ref[...]
    o_ref[...] = jnp.maximum(y, 0.0)


def gru_fc(gi_tbf, seq_len, p):
    """gi_tbf: (T, B, 3H) f32 time-major; returns (B, 128)."""
    T, B, H3 = gi_tbf.shape
    Dout = p["w6"].shape[1]
    lens = seq_len.reshape(B, 1).astype(jnp.int32)
    args = (gi_tbf, lens, p["whh"], p["bhh"],
            p["w5"], p["b5"], p["w6"], p["b6"])
    return pl.pallas_call(
        gru_fc_kernel,
        out_shape=jax.ShapeDtypeStruct((B, Dout), jnp.float32),
        grid=(1,),
        in_specs=[_full_spec(a.shape) for a in args],
        out_specs=_full_spec((B, Dout)),
        compiler_params=pltpu.CompilerParams(
            dimension_semantics=("arbitrary",)),
    )(*args)


# ----------------------------------------------------------------------------
# Full Text_Encoder forward (encoder_output_normalized=False, module default)
# ----------------------------------------------------------------------------
def text_encoder_forward(caption, p):
    B, T = caption.shape
    # compute_sequence_length: number of non-zero (non-padding) tokens per row
    seq_len = jnp.sum((caption > 0).astype(jnp.int32), axis=1)        # (B,)

    # TODO(synk): embedding lookup (dynamic gather) done in plain JAX glue.
    # Time-major from the start so no activation transpose is needed later.
    x = jnp.take(p["emb"], caption.T, axis=0).astype(jnp.float32)     # (T, B, 128)
    x = x.reshape(T * B, 128)                                         # row = t*B + b

    # fused CNN stack + hoisted GRU input projection
    gi = cnn_gru_input_proj(x, p, B=B, T=T)                           # (T*B, 3H)
    gi = gi.reshape(T, B, gi.shape[1])                                # free reshape

    # GRU recurrence + last-valid-step select + fc5 + fc6 (single kernel)
    out = gru_fc(gi, seq_len, p)                                      # (B, 128)
    return out


# ----------------------------------------------------------------------------
# Parameters (stored in kernel-ready layout; relayout done ONCE here)
# ----------------------------------------------------------------------------
def _conv_to_kernel_layout(w_pt):
    """PyTorch Conv1d weight (Cout, Cin, 3) -> (3*Cin, Cout) bf16, tap order
    [x_{t-1} | x_t | x_{t+1}]."""
    Cout, Cin, K = w_pt.shape
    return jnp.transpose(w_pt, (2, 1, 0)).reshape(K * Cin, Cout).astype(jnp.bfloat16)


def init_params(key, vocab_size, emb_size=128):
    ks = jax.random.split(key, 24)
    s = 0.05
    H = 256
    rn = lambda k, shape: jax.random.normal(k, shape, jnp.float32) * s

    w1 = rn(ks[1], (128, 128, 3))
    w2 = rn(ks[3], (128, 128, 3))
    w3 = rn(ks[7], (256, 128, 3))
    w4 = rn(ks[9], (256, 256, 3))

    return {
        "emb": rn(ks[0], (vocab_size, emb_size)),
        "w1": _conv_to_kernel_layout(w1), "b1": rn(ks[2], (128,)).reshape(1, 128),
        "w2": _conv_to_kernel_layout(w2), "b2": rn(ks[4], (128,)).reshape(1, 128),
        "g1": (1.0 + rn(ks[5], (128,))).reshape(1, 128),
        "be1": rn(ks[6], (128,)).reshape(1, 128),
        "w3": _conv_to_kernel_layout(w3), "b3": rn(ks[8], (256,)).reshape(1, 256),
        "w4": _conv_to_kernel_layout(w4), "b4": rn(ks[10], (256,)).reshape(1, 256),
        "g2": (1.0 + rn(ks[11], (256,))).reshape(1, 256),
        "be2": rn(ks[12], (256,)).reshape(1, 256),
        # GRU: gate order [r | z | n], stored as (In, 3H) / (H, 3H), bf16 MXU operands
        "wih": rn(ks[13], (256, 3 * H)).astype(jnp.bfloat16),
        "whh": rn(ks[14], (H, 3 * H)).astype(jnp.bfloat16),
        "bih": rn(ks[15], (3 * H,)).reshape(1, 3 * H),
        "bhh": rn(ks[16], (3 * H,)).reshape(1, 3 * H),
        "w5": rn(ks[17], (256, 256)).astype(jnp.bfloat16),
        "b5": rn(ks[18], (256,)).reshape(1, 256),
        "w6": rn(ks[19], (256, 128)).astype(jnp.bfloat16),
        "b6": rn(ks[20], (128,)).reshape(1, 128),
    }


if __name__ == "__main__":
    key = jax.random.PRNGKey(0)
    k_cap, k_par = jax.random.split(key)

    B, T, vocab = 2, 8, 50
    caption = jax.random.randint(k_cap, (B, T), 1, vocab).astype(jnp.int32)
    # make row 1 shorter (trailing zeros = padding), like real caption batches
    caption = caption.at[1, 5:].set(0)

    params = init_params(k_par, vocab_size=vocab, emb_size=128)

    out = text_encoder_forward(caption, params)
    out = jax.block_until_ready(out)
    assert out.shape == (B, 128) and out.dtype == jnp.float32
    print("KERNEL_OK")
</pallas_src>

<mosaic_0001>
module attributes {stable_mosaic.version = 11 : i64} {
  func.func @kernel(%arg0: i32, %arg1: memref<16x128xf32, #tpu.memory_space<vmem>>, %arg2: memref<384x128xbf16, #tpu.memory_space<vmem>>, %arg3: memref<1x128xf32, #tpu.memory_space<vmem>>, %arg4: memref<384x128xbf16, #tpu.memory_space<vmem>>, %arg5: memref<1x128xf32, #tpu.memory_space<vmem>>, %arg6: memref<1x128xf32, #tpu.memory_space<vmem>>, %arg7: memref<1x128xf32, #tpu.memory_space<vmem>>, %arg8: memref<384x256xbf16, #tpu.memory_space<vmem>>, %arg9: memref<1x256xf32, #tpu.memory_space<vmem>>, %arg10: memref<768x256xbf16, #tpu.memory_space<vmem>>, %arg11: memref<1x256xf32, #tpu.memory_space<vmem>>, %arg12: memref<1x256xf32, #tpu.memory_space<vmem>>, %arg13: memref<1x256xf32, #tpu.memory_space<vmem>>, %arg14: memref<256x768xbf16, #tpu.memory_space<vmem>>, %arg15: memref<1x768xf32, #tpu.memory_space<vmem>>, %arg16: memref<16x768xf32, #tpu.memory_space<vmem>>) attributes {dimension_semantics = [#tpu.dimension_semantics<arbitrary>], iteration_bounds = array<i64: 1>, scalar_prefetch = 0 : i64, scratch_operands = 0 : i64, tpu.core_type = #tpu.core_type<tc>, window_params = [{pipeline_mode = #tpu.pipeline_mode<synchronous>, transform_indices = @transform_0, window_bounds = array<i64: 16, 128>}, {pipeline_mode = #tpu.pipeline_mode<synchronous>, transform_indices = @transform_1, window_bounds = array<i64: 384, 128>}, {pipeline_mode = #tpu.pipeline_mode<synchronous>, transform_indices = @transform_2, window_bounds = array<i64: 1, 128>}, {pipeline_mode = #tpu.pipeline_mode<synchronous>, transform_indices = @transform_3, window_bounds = array<i64: 384, 128>}, {pipeline_mode = #tpu.pipeline_mode<synchronous>, transform_indices = @transform_4, window_bounds = array<i64: 1, 128>}, {pipeline_mode = #tpu.pipeline_mode<synchronous>, transform_indices = @transform_5, window_bounds = array<i64: 1, 128>}, {pipeline_mode = #tpu.pipeline_mode<synchronous>, transform_indices = @transform_6, window_bounds = array<i64: 1, 128>}, {pipeline_mode = #tpu.pipeline_mode<synchronous>, transform_indices = @transform_7, window_bounds = array<i64: 384, 256>}, {pipeline_mode = #tpu.pipeline_mode<synchronous>, transform_indices = @transform_8, window_bounds = array<i64: 1, 256>}, {pipeline_mode = #tpu.pipeline_mode<synchronous>, transform_indices = @transform_9, window_bounds = array<i64: 768, 256>}, {pipeline_mode = #tpu.pipeline_mode<synchronous>, transform_indices = @transform_10, window_bounds = array<i64: 1, 256>}, {pipeline_mode = #tpu.pipeline_mode<synchronous>, transform_indices = @transform_11, window_bounds = array<i64: 1, 256>}, {pipeline_mode = #tpu.pipeline_mode<synchronous>, transform_indices = @transform_12, window_bounds = array<i64: 1, 256>}, {pipeline_mode = #tpu.pipeline_mode<synchronous>, transform_indices = @transform_13, window_bounds = array<i64: 256, 768>}, {pipeline_mode = #tpu.pipeline_mode<synchronous>, transform_indices = @transform_14, window_bounds = array<i64: 1, 768>}, {pipeline_mode = #tpu.pipeline_mode<synchronous>, transform_indices = @transform_15, window_bounds = array<i64: 16, 768>}]} {
    %0 = tpu.iota {dimensions = array<i32: 0>} : vector<16x1xi32>
    %c2_i32 = arith.constant 2 : i32
    %1 = vector.broadcast %c2_i32 : i32 to vector<16x1xi32>
    %2 = arith.cmpi sge, %0, %1 : vector<16x1xi32>
    %c14_i32 = arith.constant 14 : i32
    %3 = vector.broadcast %c14_i32 : i32 to vector<16x1xi32>
    %4 = arith.cmpi slt, %0, %3 : vector<16x1xi32>
    %c0 = arith.constant 0 : index
    %c0_0 = arith.constant 0 : index
    %5 = vector.load %arg1[%c0, %c0_0] : memref<16x128xf32, #tpu.memory_space<vmem>>, vector<16x128xf32>
    %c2_i32_1 = arith.constant 2 : i32
    %6 = tpu.dynamic_rotate %5 by %c2_i32_1 dim 0 : vector<16x128xf32>, i32 -> vector<16x128xf32>
    %cst = arith.constant 0.000000e+00 : f32
    %7 = vector.shape_cast %2 : vector<16x1xi1> to vector<16x1xi1>
    %8 = vector.broadcast %7 : vector<16x1xi1> to vector<16x128xi1>
    %9 = vector.broadcast %cst : f32 to vector<16x128xf32>
    %10 = arith.select %8, %6, %9 : vector<16x128xi1>, vector<16x128xf32>
    %c14_i32_2 = arith.constant 14 : i32
    %11 = tpu.dynamic_rotate %5 by %c14_i32_2 dim 0 : vector<16x128xf32>, i32 -> vector<16x128xf32>
    %cst_3 = arith.constant 0.000000e+00 : f32
    %12 = vector.shape_cast %4 : vector<16x1xi1> to vector<16x1xi1>
    %13 = vector.broadcast %12 : vector<16x1xi1> to vector<16x128xi1>
    %14 = vector.broadcast %cst_3 : f32 to vector<16x128xf32>
    %15 = arith.select %13, %11, %14 : vector<16x128xi1>, vector<16x128xf32>
    %16 = tpu.concatenate %10, %5, %15 in 1 : vector<16x128xf32>, vector<16x128xf32>, vector<16x128xf32> -> vector<16x384xf32>
    %17 = arith.truncf %16 : vector<16x384xf32> to vector<16x384xbf16>
    %c0_4 = arith.constant 0 : index
    %c0_5 = arith.constant 0 : index
    %18 = vector.load %arg2[%c0_4, %c0_5] : memref<384x128xbf16, #tpu.memory_space<vmem>>, vector<384x128xbf16>
    %cst_6 = arith.constant dense<0.000000e+00> : vector<16x128xf32>
    %19 = tpu.matmul %17, %18, %cst_6 {dimension_numbers = #tpu.dot_dimension_numbers<[1], [0], [0], [1], [0, 0, 1, 1], [], []>} : vector<16x384xbf16>, vector<384x128xbf16>, vector<16x128xf32> -> vector<16x128xf32>
    %c0_7 = arith.constant 0 : index
    %c0_8 = arith.constant 0 : index
    %20 = vector.load %arg3[%c0_7, %c0_8] : memref<1x128xf32, #tpu.memory_space<vmem>>, vector<1x128xf32>
    %21 = vector.broadcast %20 : vector<1x128xf32> to vector<16x128xf32>
    %22 = arith.addf %19, %21 : vector<16x128xf32>
    %cst_9 = arith.constant 0.000000e+00 : f32
    %23 = vector.broadcast %cst_9 : f32 to vector<16x128xf32>
    %24 = arith.maximumf %22, %23 : vector<16x128xf32>
    %c2_i32_10 = arith.constant 2 : i32
    %25 = tpu.dynamic_rotate %24 by %c2_i32_10 dim 0 : vector<16x128xf32>, i32 -> vector<16x128xf32>
    %cst_11 = arith.constant 0.000000e+00 : f32
    %26 = vector.shape_cast %2 : vector<16x1xi1> to vector<16x1xi1>
    %27 = vector.broadcast %26 : vector<16x1xi1> to vector<16x128xi1>
    %28 = vector.broadcast %cst_11 : f32 to vector<16x128xf32>
    %29 = arith.select %27, %25, %28 : vector<16x128xi1>, vector<16x128xf32>
    %c14_i32_12 = arith.constant 14 : i32
    %30 = tpu.dynamic_rotate %24 by %c14_i32_12 dim 0 : vector<16x128xf32>, i32 -> vector<16x128xf32>
    %cst_13 = arith.constant 0.000000e+00 : f32
    %31 = vector.shape_cast %4 : vector<16x1xi1> to vector<16x1xi1>
    %32 = vector.broadcast %31 : vector<16x1xi1> to vector<16x128xi1>
    %33 = vector.broadcast %cst_13 : f32 to vector<16x128xf32>
    %34 = arith.select %32, %30, %33 : vector<16x128xi1>, vector<16x128xf32>
    %35 = tpu.concatenate %29, %24, %34 in 1 : vector<16x128xf32>, vector<16x128xf32>, vector<16x128xf32> -> vector<16x384xf32>
    %36 = arith.truncf %35 : vector<16x384xf32> to vector<16x384xbf16>
    %c0_14 = arith.constant 0 : index
    %c0_15 = arith.constant 0 : index
    %37 = vector.load %arg4[%c0_14, %c0_15] : memref<384x128xbf16, #tpu.memory_space<vmem>>, vector<384x128xbf16>
    %cst_16 = arith.constant dense<0.000000e+00> : vector<16x128xf32>
    %38 = tpu.matmul %36, %37, %cst_16 {dimension_numbers = #tpu.dot_dimension_numbers<[1], [0], [0], [1], [0, 0, 1, 1], [], []>} : vector<16x384xbf16>, vector<384x128xbf16>, vector<16x128xf32> -> vector<16x128xf32>
    %c0_17 = arith.constant 0 : index
    %c0_18 = arith.constant 0 : index
    %39 = vector.load %arg5[%c0_17, %c0_18] : memref<1x128xf32, #tpu.memory_space<vmem>>, vector<1x128xf32>
    %40 = vector.broadcast %39 : vector<1x128xf32> to vector<16x128xf32>
    %41 = arith.addf %38, %40 : vector<16x128xf32>
    %cst_19 = arith.constant 0.000000e+00 : f32
    %42 = vector.broadcast %cst_19 : f32 to vector<16x128xf32>
    %43 = arith.maximumf %41, %42 : vector<16x128xf32>
    %cst_20 = arith.constant dense<0.000000e+00> : vector<128xf32>
    %44 = vector.multi_reduction <add>, %43, %cst_20 [0] : vector<16x128xf32> to vector<128xf32>
    %45 = vector.shape_cast %44 : vector<128xf32> to vector<1x128xf32>
    %46 = arith.mulf %43, %43 : vector<16x128xf32>
    %cst_21 = arith.constant dense<0.000000e+00> : vector<128xf32>
    %47 = vector.multi_reduction <add>, %46, %cst_21 [0] : vector<16x128xf32> to vector<128xf32>
    %48 = vector.shape_cast %47 : vector<128xf32> to vector<1x128xf32>
    %cst_22 = arith.constant 6.250000e-02 : f32
    %49 = vector.broadcast %cst_22 : f32 to vector<1x128xf32>
    %50 = arith.mulf %45, %49 : vector<1x128xf32>
    %cst_23 = arith.constant 6.250000e-02 : f32
    %51 = vector.broadcast %cst_23 : f32 to vector<1x128xf32>
    %52 = arith.mulf %48, %51 : vector<1x128xf32>
    %53 = arith.mulf %50, %50 : vector<1x128xf32>
    %54 = arith.subf %52, %53 : vector<1x128xf32>
    %cst_24 = arith.constant 9.99999974E-6 : f32
    %55 = vector.broadcast %cst_24 : f32 to vector<1x128xf32>
    %56 = arith.addf %54, %55 : vector<1x128xf32>
    %57 = math.rsqrt %56 : vector<1x128xf32>
    %58 = vector.broadcast %50 : vector<1x128xf32> to vector<16x128xf32>
    %59 = arith.subf %43, %58 : vector<16x128xf32>
    %60 = vector.broadcast %57 : vector<1x128xf32> to vector<16x128xf32>
    %61 = arith.mulf %59, %60 : vector<16x128xf32>
    %c0_25 = arith.constant 0 : index
    %c0_26 = arith.constant 0 : index
    %62 = vector.load %arg6[%c0_25, %c0_26] : memref<1x128xf32, #tpu.memory_space<vmem>>, vector<1x128xf32>
    %63 = vector.broadcast %62 : vector<1x128xf32> to vector<16x128xf32>
    %64 = arith.mulf %61, %63 : vector<16x128xf32>
    %c0_27 = arith.constant 0 : index
    %c0_28 = arith.constant 0 : index
    %65 = vector.load %arg7[%c0_27, %c0_28] : memref<1x128xf32, #tpu.memory_space<vmem>>, vector<1x128xf32>
    %66 = vector.broadcast %65 : vector<1x128xf32> to vector<16x128xf32>
    %67 = arith.addf %64, %66 : vector<16x128xf32>
    %c2_i32_29 = arith.constant 2 : i32
    %68 = tpu.dynamic_rotate %67 by %c2_i32_29 dim 0 : vector<16x128xf32>, i32 -> vector<16x128xf32>
    %cst_30 = arith.constant 0.000000e+00 : f32
    %69 = vector.shape_cast %2 : vector<16x1xi1> to vector<16x1xi1>
    %70 = vector.broadcast %69 : vector<16x1xi1> to vector<16x128xi1>
    %71 = vector.broadcast %cst_30 : f32 to vector<16x128xf32>
    %72 = arith.select %70, %68, %71 : vector<16x128xi1>, vector<16x128xf32>
    %c14_i32_31 = arith.constant 14 : i32
    %73 = tpu.dynamic_rotate %67 by %c14_i32_31 dim 0 : vector<16x128xf32>, i32 -> vector<16x128xf32>
    %cst_32 = arith.constant 0.000000e+00 : f32
    %74 = vector.shape_cast %4 : vector<16x1xi1> to vector<16x1xi1>
    %75 = vector.broadcast %74 : vector<16x1xi1> to vector<16x128xi1>
    %76 = vector.broadcast %cst_32 : f32 to vector<16x128xf32>
    %77 = arith.select %75, %73, %76 : vector<16x128xi1>, vector<16x128xf32>
    %78 = tpu.concatenate %72, %67, %77 in 1 : vector<16x128xf32>, vector<16x128xf32>, vector<16x128xf32> -> vector<16x384xf32>
    %79 = arith.truncf %78 : vector<16x384xf32> to vector<16x384xbf16>
    %c0_33 = arith.constant 0 : index
    %c0_34 = arith.constant 0 : index
    %80 = vector.load %arg8[%c0_33, %c0_34] : memref<384x256xbf16, #tpu.memory_space<vmem>>, vector<384x256xbf16>
    %cst_35 = arith.constant dense<0.000000e+00> : vector<16x256xf32>
    %81 = tpu.matmul %79, %80, %cst_35 {dimension_numbers = #tpu.dot_dimension_numbers<[1], [0], [0], [1], [0, 0, 1, 1], [], []>} : vector<16x384xbf16>, vector<384x256xbf16>, vector<16x256xf32> -> vector<16x256xf32>
    %c0_36 = arith.constant 0 : index
    %c0_37 = arith.constant 0 : index
    %82 = vector.load %arg9[%c0_36, %c0_37] : memref<1x256xf32, #tpu.memory_space<vmem>>, vector<1x256xf32>
    %83 = vector.broadcast %82 : vector<1x256xf32> to vector<16x256xf32>
    %84 = arith.addf %81, %83 : vector<16x256xf32>
    %cst_38 = arith.constant 0.000000e+00 : f32
    %85 = vector.broadcast %cst_38 : f32 to vector<16x256xf32>
    %86 = arith.maximumf %84, %85 : vector<16x256xf32>
    %c2_i32_39 = arith.constant 2 : i32
    %87 = tpu.dynamic_rotate %86 by %c2_i32_39 dim 0 : vector<16x256xf32>, i32 -> vector<16x256xf32>
    %cst_40 = arith.constant 0.000000e+00 : f32
    %88 = vector.shape_cast %2 : vector<16x1xi1> to vector<16x1xi1>
    %89 = vector.broadcast %88 : vector<16x1xi1> to vector<16x256xi1>
    %90 = vector.broadcast %cst_40 : f32 to vector<16x256xf32>
    %91 = arith.select %89, %87, %90 : vector<16x256xi1>, vector<16x256xf32>
    %c14_i32_41 = arith.constant 14 : i32
    %92 = tpu.dynamic_rotate %86 by %c14_i32_41 dim 0 : vector<16x256xf32>, i32 -> vector<16x256xf32>
    %cst_42 = arith.constant 0.000000e+00 : f32
    %93 = vector.shape_cast %4 : vector<16x1xi1> to vector<16x1xi1>
    %94 = vector.broadcast %93 : vector<16x1xi1> to vector<16x256xi1>
    %95 = vector.broadcast %cst_42 : f32 to vector<16x256xf32>
    %96 = arith.select %94, %92, %95 : vector<16x256xi1>, vector<16x256xf32>
    %97 = tpu.concatenate %91, %86, %96 in 1 : vector<16x256xf32>, vector<16x256xf32>, vector<16x256xf32> -> vector<16x768xf32>
    %98 = arith.truncf %97 : vector<16x768xf32> to vector<16x768xbf16>
    %c0_43 = arith.constant 0 : index
    %c0_44 = arith.constant 0 : index
    %99 = vector.load %arg10[%c0_43, %c0_44] : memref<768x256xbf16, #tpu.memory_space<vmem>>, vector<768x256xbf16>
    %cst_45 = arith.constant dense<0.000000e+00> : vector<16x256xf32>
    %100 = tpu.matmul %98, %99, %cst_45 {dimension_numbers = #tpu.dot_dimension_numbers<[1], [0], [0], [1], [0, 0, 1, 1], [], []>} : vector<16x768xbf16>, vector<768x256xbf16>, vector<16x256xf32> -> vector<16x256xf32>
    %c0_46 = arith.constant 0 : index
    %c0_47 = arith.constant 0 : index
    %101 = vector.load %arg11[%c0_46, %c0_47] : memref<1x256xf32, #tpu.memory_space<vmem>>, vector<1x256xf32>
    %102 = vector.broadcast %101 : vector<1x256xf32> to vector<16x256xf32>
    %103 = arith.addf %100, %102 : vector<16x256xf32>
    %cst_48 = arith.constant 0.000000e+00 : f32
    %104 = vector.broadcast %cst_48 : f32 to vector<16x256xf32>
    %105 = arith.maximumf %103, %104 : vector<16x256xf32>
    %cst_49 = arith.constant dense<0.000000e+00> : vector<256xf32>
    %106 = vector.multi_reduction <add>, %105, %cst_49 [0] : vector<16x256xf32> to vector<256xf32>
    %107 = vector.shape_cast %106 : vector<256xf32> to vector<1x256xf32>
    %108 = arith.mulf %105, %105 : vector<16x256xf32>
    %cst_50 = arith.constant dense<0.000000e+00> : vector<256xf32>
    %109 = vector.multi_reduction <add>, %108, %cst_50 [0] : vector<16x256xf32> to vector<256xf32>
    %110 = vector.shape_cast %109 : vector<256xf32> to vector<1x256xf32>
    %cst_51 = arith.constant 6.250000e-02 : f32
    %111 = vector.broadcast %cst_51 : f32 to vector<1x256xf32>
    %112 = arith.mulf %107, %111 : vector<1x256xf32>
    %cst_52 = arith.constant 6.250000e-02 : f32
    %113 = vector.broadcast %cst_52 : f32 to vector<1x256xf32>
    %114 = arith.mulf %110, %113 : vector<1x256xf32>
    %115 = arith.mulf %112, %112 : vector<1x256xf32>
    %116 = arith.subf %114, %115 : vector<1x256xf32>
    %cst_53 = arith.constant 9.99999974E-6 : f32
    %117 = vector.broadcast %cst_53 : f32 to vector<1x256xf32>
    %118 = arith.addf %116, %117 : vector<1x256xf32>
    %119 = math.rsqrt %118 : vector<1x256xf32>
    %120 = vector.broadcast %112 : vector<1x256xf32> to vector<16x256xf32>
    %121 = arith.subf %105, %120 : vector<16x256xf32>
    %122 = vector.broadcast %119 : vector<1x256xf32> to vector<16x256xf32>
    %123 = arith.mulf %121, %122 : vector<16x256xf32>
    %c0_54 = arith.constant 0 : index
    %c0_55 = arith.constant 0 : index
    %124 = vector.load %arg12[%c0_54, %c0_55] : memref<1x256xf32, #tpu.memory_space<vmem>>, vector<1x256xf32>
    %125 = vector.broadcast %124 : vector<1x256xf32> to vector<16x256xf32>
    %126 = arith.mulf %123, %125 : vector<16x256xf32>
    %c0_56 = arith.constant 0 : index
    %c0_57 = arith.constant 0 : index
    %127 = vector.load %arg13[%c0_56, %c0_57] : memref<1x256xf32, #tpu.memory_space<vmem>>, vector<1x256xf32>
    %128 = vector.broadcast %127 : vector<1x256xf32> to vector<16x256xf32>
    %129 = arith.addf %126, %128 : vector<16x256xf32>
    %130 = arith.truncf %129 : vector<16x256xf32> to vector<16x256xbf16>
    %c0_58 = arith.constant 0 : index
    %c0_59 = arith.constant 0 : index
    %131 = vector.load %arg14[%c0_58, %c0_59] : memref<256x768xbf16, #tpu.memory_space<vmem>>, vector<256x768xbf16>
    %cst_60 = arith.constant dense<0.000000e+00> : vector<16x768xf32>
    %132 = tpu.matmul %130, %131, %cst_60 {dimension_numbers = #tpu.dot_dimension_numbers<[1], [0], [0], [1], [0, 0, 1, 1], [], []>} : vector<16x256xbf16>, vector<256x768xbf16>, vector<16x768xf32> -> vector<16x768xf32>
    %c0_61 = arith.constant 0 : index
    %c0_62 = arith.constant 0 : index
    %133 = vector.load %arg15[%c0_61, %c0_62] : memref<1x768xf32, #tpu.memory_space<vmem>>, vector<1x768xf32>
    %134 = vector.broadcast %133 : vector<1x768xf32> to vector<16x768xf32>
    %135 = arith.addf %132, %134 : vector<16x768xf32>
    %c0_63 = arith.constant 0 : index
    %c0_64 = arith.constant 0 : index
    %136 = vector.load %arg16[%c0_63, %c0_64] : memref<16x768xf32, #tpu.memory_space<vmem>>, vector<16x768xf32>
    tpu.vector_store %arg16[%c0_63, %c0_64], %135 {strides = array<i32>} : memref<16x768xf32, #tpu.memory_space<vmem>>, vector<16x768xf32>,
    return
  }
  func.func @transform_0(%arg0: i32) -> (i32, i32) {
    %c0_i32 = arith.constant 0 : i32
    %c0_i32_0 = arith.constant 0 : i32
    %c0_i32_1 = arith.constant 0 : i32
    return %c0_i32, %c0_i32_0 : i32, i32
  }
  func.func @transform_1(%arg0: i32) -> (i32, i32) {
    %c0_i32 = arith.constant 0 : i32
    %c0_i32_0 = arith.constant 0 : i32
    %c0_i32_1 = arith.constant 0 : i32
    return %c0_i32, %c0_i32_0 : i32, i32
  }
  func.func @transform_2(%arg0: i32) -> (i32, i32) {
    %c0_i32 = arith.constant 0 : i32
    %c0_i32_0 = arith.constant 0 : i32
    %c0_i32_1 = arith.constant 0 : i32
    return %c0_i32, %c0_i32_0 : i32, i32
  }
  func.func @transform_3(%arg0: i32) -> (i32, i32) {
    %c0_i32 = arith.constant 0 : i32
    %c0_i32_0 = arith.constant 0 : i32
    %c0_i32_1 = arith.constant 0 : i32
    return %c0_i32, %c0_i32_0 : i32, i32
  }
  func.func @transform_4(%arg0: i32) -> (i32, i32) {
    %c0_i32 = arith.constant 0 : i32
    %c0_i32_0 = arith.constant 0 : i32
    %c0_i32_1 = arith.constant 0 : i32
    return %c0_i32, %c0_i32_0 : i32, i32
  }
  func.func @transform_5(%arg0: i32) -> (i32, i32) {
    %c0_i32 = arith.constant 0 : i32
    %c0_i32_0 = arith.constant 0 : i32
    %c0_i32_1 = arith.constant 0 : i32
    return %c0_i32, %c0_i32_0 : i32, i32
  }
  func.func @transform_6(%arg0: i32) -> (i32, i32) {
    %c0_i32 = arith.constant 0 : i32
    %c0_i32_0 = arith.constant 0 : i32
    %c0_i32_1 = arith.constant 0 : i32
    return %c0_i32, %c0_i32_0 : i32, i32
  }
  func.func @transform_7(%arg0: i32) -> (i32, i32) {
    %c0_i32 = arith.constant 0 : i32
    %c0_i32_0 = arith.constant 0 : i32
    %c0_i32_1 = arith.constant 0 : i32
    return %c0_i32, %c0_i32_0 : i32, i32
  }
  func.func @transform_8(%arg0: i32) -> (i32, i32) {
    %c0_i32 = arith.constant 0 : i32
    %c0_i32_0 = arith.constant 0 : i32
    %c0_i32_1 = arith.constant 0 : i32
    return %c0_i32, %c0_i32_0 : i32, i32
  }
  func.func @transform_9(%arg0: i32) -> (i32, i32) {
    %c0_i32 = arith.constant 0 : i32
    %c0_i32_0 = arith.constant 0 : i32
    %c0_i32_1 = arith.constant 0 : i32
    return %c0_i32, %c0_i32_0 : i32, i32
  }
  func.func @transform_10(%arg0: i32) -> (i32, i32) {
    %c0_i32 = arith.constant 0 : i32
    %c0_i32_0 = arith.constant 0 : i32
    %c0_i32_1 = arith.constant 0 : i32
    return %c0_i32, %c0_i32_0 : i32, i32
  }
  func.func @transform_11(%arg0: i32) -> (i32, i32) {
    %c0_i32 = arith.constant 0 : i32
    %c0_i32_0 = arith.constant 0 : i32
    %c0_i32_1 = arith.constant 0 : i32
    return %c0_i32, %c0_i32_0 : i32, i32
  }
  func.func @transform_12(%arg0: i32) -> (i32, i32) {
    %c0_i32 = arith.constant 0 : i32
    %c0_i32_0 = arith.constant 0 : i32
    %c0_i32_1 = arith.constant 0 : i32
    return %c0_i32, %c0_i32_0 : i32, i32
  }
  func.func @transform_13(%arg0: i32) -> (i32, i32) {
    %c0_i32 = arith.constant 0 : i32
    %c0_i32_0 = arith.constant 0 : i32
    %c0_i32_1 = arith.constant 0 : i32
    return %c0_i32, %c0_i32_0 : i32, i32
  }
  func.func @transform_14(%arg0: i32) -> (i32, i32) {
    %c0_i32 = arith.constant 0 : i32
    %c0_i32_0 = arith.constant 0 : i32
    %c0_i32_1 = arith.constant 0 : i32
    return %c0_i32, %c0_i32_0 : i32, i32
  }
  func.func @transform_15(%arg0: i32) -> (i32, i32) {
    %c0_i32 = arith.constant 0 : i32
    %c0_i32_0 = arith.constant 0 : i32
    %c0_i32_1 = arith.constant 0 : i32
    return %c0_i32, %c0_i32_0 : i32, i32
  }
}

</mosaic_0001>

<llo_original>
// kernel: tpu_custom_call.1
$region0: #{tpu_custom_call.1}
  #allocation0 [shape = 'u32[]', space=smem, size = 0x4, offset = 0x4, fixed_abs, tag = 'smem constant byte address 0x4 - core index']
  #allocation1 [shape = 'u32[144,128]{1,0:T(1,128)}', space=vmem, size = 0x12000, scoped, tag = 'internal scratch']
  %s0 = inlined_call_operand.hbm [shape: f32[16,128], index: 0, kind: input, shape index: {}]
  %s1 = inlined_call_operand.hbm [shape: bf16[384,128], index: 1, kind: input, shape index: {}]
  %s2 = inlined_call_operand.vmem [shape: f32[1,128], index: 2, kind: input, shape index: {}]
  %s3 = inlined_call_operand.hbm [shape: bf16[384,128], index: 3, kind: input, shape index: {}]
  %s4 = inlined_call_operand.hbm [shape: f32[1,128], index: 4, kind: input, shape index: {}]
  %s5 = inlined_call_operand.vmem [shape: f32[1,128], index: 5, kind: input, shape index: {}]
  %s6 = inlined_call_operand.vmem [shape: f32[1,128], index: 6, kind: input, shape index: {}]
  %s7 = inlined_call_operand.hbm [shape: bf16[384,256], index: 7, kind: input, shape index: {}]
  %s8 = inlined_call_operand.vmem [shape: f32[1,256], index: 8, kind: input, shape index: {}]
  %s9 = inlined_call_operand.hbm [shape: bf16[768,256], index: 9, kind: input, shape index: {}]
  %s10 = inlined_call_operand.vmem [shape: f32[1,256], index: 10, kind: input, shape index: {}]
  %s11 = inlined_call_operand.vmem [shape: f32[1,256], index: 11, kind: input, shape index: {}]
  %s12 = inlined_call_operand.vmem [shape: f32[1,256], index: 12, kind: input, shape index: {}]
  %s13 = inlined_call_operand.hbm [shape: bf16[256,768], index: 13, kind: input, shape index: {}]
  %s14 = inlined_call_operand.vmem [shape: f32[1,768], index: 14, kind: input, shape index: {}]
  %s15 = inlined_call_operand.hbm [shape: f32[16,768], index: 15, kind: output, shape index: {}]
  %s16 = sld [smem:[#allocation0]]
  $region98: #{tpu_custom_call.1} parent=0
    _
  %s18 = ssub.s32 1, %s16
  %s19 = scalar_select 0, %s18, %s16
  $region1: #{tpu_custom_call.1} parent=0
    #allocation2 [shape = 'u8[8192]{0}', space=vmem, size = 0x2000, scoped, tag = 'input window, operand 0, single buffered']
    #allocation3 [shape = 's32[1]{0}', space=sflag, size = 0x4, scoped, tag = 'scoped memory for tpu_custom_call.1']
    #allocation4 [shape = 's32[1]{0}', space=sflag, size = 0x4, scoped, tag = 'scoped memory for tpu_custom_call.1']
    #allocation5 [shape = 'u8[98304]{0}', space=vmem, size = 0x18000, scoped, tag = 'input window, operand 1, single buffered']
    #allocation6 [shape = 's32[1]{0}', space=sflag, size = 0x4, scoped, tag = 'scoped memory for tpu_custom_call.1']
    #allocation7 [shape = 'u8[98304]{0}', space=vmem, size = 0x18000, scoped, tag = 'input window, operand 3, single buffered']
    #allocation8 [shape = 'u8[512]{0}', space=vmem, size = 0x400, scoped, tag = 'input window, operand 4, single buffered']
    #allocation9 [shape = 's32[1]{0}', space=sflag, size = 0x4, scoped, tag = 'scoped memory for tpu_custom_call.1']
    #allocation10 [shape = 'u8[196608]{0}', space=vmem, size = 0x30000, scoped, tag = 'input window, operand 7, single buffered']
    #allocation11 [shape = 'u8[393216]{0}', space=vmem, size = 0x60000, scoped, tag = 'input window, operand 9, single buffered']
    #allocation12 [shape = 's32[1]{0}', space=sflag, size = 0x4, scoped, tag = 'scoped memory for tpu_custom_call.1']
    #allocation13 [shape = 'u8[393216]{0}', space=vmem, size = 0x60000, scoped, tag = 'input window, operand 13, single buffered']
    #allocation14 [shape = 'u8[49152]{0}', space=vmem, size = 0xc000, scoped, tag = 'output window, operand 0, single buffered']
    %20 = vsyncpa [#allocation3], 0
    %21 = vsyncpa [#allocation6], 0
    %22 = vsyncpa [#allocation9], 0
    %23 = vsyncpa [#allocation12], 0
    %24 = vsyncpa [#allocation4], 0
    // Predicated region
    $region2: #{tpu_custom_call.1} parent=1 // pred_check
      _
    $region3: #{tpu_custom_call.1} parent=1 // pred_check_branch
      %26 = sbr.rel (0) target = $region5
    $region4: #{tpu_custom_call.1} parent=1 // pred_region
      %s28 = ssub.s32 256, 256
      %29 = vsyncadd [#allocation3], %s28
      %s30 = sshll.u32 [#allocation2], 4
      %s31 = int_to_ptr.vmem [resolvable:$true] %s30
      %36 = dma.hbm_to_vmem [thread:$0]  %s0, 256, %s31, [#allocation3], 128, 128, 8
    $region5: #{tpu_custom_call.1} parent=1 // pred_fallthru
      _
    // Predicated region
    $region6: #{tpu_custom_call.1} parent=1 // pred_check
      _
    $region7: #{tpu_custom_call.1} parent=1 // pred_check_branch
      %38 = sbr.rel (0) target = $region9
    $region8: #{tpu_custom_call.1} parent=1 // pred_region
      %s40 = ssub.s32 3072, 3072
      %41 = vsyncadd [#allocation6], %s40
      %s42 = sshll.u32 [#allocation5], 4
      %s43 = int_to_ptr.vmem [resolvable:$true] %s42
      %48 = dma.hbm_to_vmem [thread:$0]  %s1, 3072, %s43, [#allocation6], 64, 64, 4
    $region9: #{tpu_custom_call.1} parent=1 // pred_fallthru
      _
    // Predicated region
    $region10: #{tpu_custom_call.1} parent=1 // pred_check
      _
    $region11: #{tpu_custom_call.1} parent=1 // pred_check_branch
      %50 = sbr.rel (0) target = $region13
    $region12: #{tpu_custom_call.1} parent=1 // pred_region
      _
    $region13: #{tpu_custom_call.1} parent=1 // pred_fallthru
      _
    // Predicated region
    $region14: #{tpu_custom_call.1} parent=1 // pred_check
      _
    $region15: #{tpu_custom_call.1} parent=1 // pred_check_branch
      %52 = sbr.rel (0) target = $region17
    $region16: #{tpu_custom_call.1} parent=1 // pred_region
      %s54 = ssub.s32 3072, 3072
      %55 = vsyncadd [#allocation6], %s54
      %s56 = sshll.u32 [#allocation7], 4
      %s57 = int_to_ptr.vmem [resolvable:$true] %s56
      %62 = dma.hbm_to_vmem [thread:$0]  %s3, 3072, %s57, [#allocation6], 64, 64, 4
    $region17: #{tpu_custom_call.1} parent=1 // pred_fallthru
      _
    // Predicated region
    $region18: #{tpu_custom_call.1} parent=1 // pred_check
      _
    $region19: #{tpu_custom_call.1} parent=1 // pred_check_branch
      %64 = sbr.rel (0) target = $region21
    $region20: #{tpu_custom_call.1} parent=1 // pred_region
      %s66 = ssub.s32 16, 16
      %67 = vsyncadd [#allocation9], %s66
      %s69 = sshll.u32 [#allocation8], 4
      %s70 = int_to_ptr.vmem [resolvable:$true] %s69
      %72 = dma.hbm_to_vmem [thread:$0]  %s4, 16, %s70, [#allocation9]
    $region21: #{tpu_custom_call.1} parent=1 // pred_fallthru
      _
    // Predicated region
    $region22: #{tpu_custom_call.1} parent=1 // pred_check
      _
    $region23: #{tpu_custom_call.1} parent=1 // pred_check_branch
      %74 = sbr.rel (0) target = $region25
    $region24: #{tpu_custom_call.1} parent=1 // pred_region
      _
    $region25: #{tpu_custom_call.1} parent=1 // pred_fallthru
      _
    // Predicated region
    $region26: #{tpu_custom_call.1} parent=1 // pred_check
      _
    $region27: #{tpu_custom_call.1} parent=1 // pred_check_branch
      %76 = sbr.rel (0) target = $region29
    $region28: #{tpu_custom_call.1} parent=1 // pred_region
      _
    $region29: #{tpu_custom_call.1} parent=1 // pred_fallthru
      _
    // Predicated region
    $region30: #{tpu_custom_call.1} parent=1 // pred_check
      _
    $region31: #{tpu_custom_call.1} parent=1 // pred_check_branch
      %78 = sbr.rel (0) target = $region33
    $region32: #{tpu_custom_call.1} parent=1 // pred_region
      %s80 = ssub.s32 6144, 6144
      %81 = vsyncadd [#allocation9], %s80
      %s82 = sshll.u32 [#allocation10], 4
      %s83 = int_to_ptr.vmem [resolvable:$true] %s82
      %88 = dma.hbm_to_vmem [thread:$0]  %s7, 6144, %s83, [#allocation9], 128, 128, 8
    $region33: #{tpu_custom_call.1} parent=1 // pred_fallthru
      _
    // Predicated region
    $region34: #{tpu_custom_call.1} parent=1 // pred_check
      _
    $region35: #{tpu_custom_call.1} parent=1 // pred_check_branch
      %90 = sbr.rel (0) target = $region37
    $region36: #{tpu_custom_call.1} parent=1 // pred_region
      _
    $region37: #{tpu_custom_call.1} parent=1 // pred_fallthru
      _
    // Predicated region
    $region38: #{tpu_custom_call.1} parent=1 // pred_check
      _
    $region39: #{tpu_custom_call.1} parent=1 // pred_check_branch
      %92 = sbr.rel (0) target = $region41
    $region40: #{tpu_custom_call.1} parent=1 // pred_region
      %s94 = ssub.s32 12288, 12288
      %95 = vsyncadd [#allocation12], %s94
      %s96 = sshll.u32 [#allocation11], 4
      %s97 = int_to_ptr.vmem [resolvable:$true] %s96
      %102 = dma.hbm_to_vmem [thread:$0]  %s9, 12288, %s97, [#allocation12], 128, 128, 8
    $region41: #{tpu_custom_call.1} parent=1 // pred_fallthru
      _
    // Predicated region
    $region42: #{tpu_custom_call.1} parent=1 // pred_check
      _
    $region43: #{tpu_custom_call.1} parent=1 // pred_check_branch
      %104 = sbr.rel (0) target = $region45
    $region44: #{tpu_custom_call.1} parent=1 // pred_region
      _
    $region45: #{tpu_custom_call.1} parent=1 // pred_fallthru
      _
    // Predicated region
    $region46: #{tpu_custom_call.1} parent=1 // pred_check
      _
    $region47: #{tpu_custom_call.1} parent=1 // pred_check_branch
      %106 = sbr.rel (0) target = $region49
    $region48: #{tpu_custom_call.1} parent=1 // pred_region
      _
    $region49: #{tpu_custom_call.1} parent=1 // pred_fallthru
      _
    // Predicated region
    $region50: #{tpu_custom_call.1} parent=1 // pred_check
      _
    $region51: #{tpu_custom_call.1} parent=1 // pred_check_branch
      %108 = sbr.rel (0) target = $region53
    $region52: #{tpu_custom_call.1} parent=1 // pred_region
      _
    $region53: #{tpu_custom_call.1} parent=1 // pred_fallthru
      _
    // Predicated region
    $region54: #{tpu_custom_call.1} parent=1 // pred_check
      _
    $region55: #{tpu_custom_call.1} parent=1 // pred_check_branch
      %110 = sbr.rel (0) target = $region57
    $region56: #{tpu_custom_call.1} parent=1 // pred_region
      %s112 = ssub.s32 12288, 12288
      %113 = vsyncadd [#allocation12], %s112
      %s114 = sshll.u32 [#allocation13], 4
      %s115 = int_to_ptr.vmem [resolvable:$true] %s114
      %120 = dma.hbm_to_vmem [thread:$0]  %s13, 12288, %s115, [#allocation12], 384, 384, 24
    $region57: #{tpu_custom_call.1} parent=1 // pred_fallthru
      _
    // Predicated region
    $region58: #{tpu_custom_call.1} parent=1 // pred_check
      _
    $region59: #{tpu_custom_call.1} parent=1 // pred_check_branch
      %122 = sbr.rel (0) target = $region61
    $region60: #{tpu_custom_call.1} parent=1 // pred_region
      _
    $region61: #{tpu_custom_call.1} parent=1 // pred_fallthru
      _
    // Predicated region
    $region62: #{tpu_custom_call.1} parent=1 // pred_check
      _
    $region63: #{tpu_custom_call.1} parent=1 // pred_check_branch
      %124 = sbr.rel (0) target = $region65
    $region64: #{tpu_custom_call.1} parent=1 // pred_region
      %125 = dma.done [#allocation3], 256
    $region65: #{tpu_custom_call.1} parent=1 // pred_fallthru
      _
    // Predicated region
    $region66: #{tpu_custom_call.1} parent=1 // pred_check
      _
    $region67: #{tpu_custom_call.1} parent=1 // pred_check_branch
      %127 = sbr.rel (0) target = $region69
    $region68: #{tpu_custom_call.1} parent=1 // pred_region
      %128 = dma.done [#allocation6], 3072
    $region69: #{tpu_custom_call.1} parent=1 // pred_fallthru
      _
    // Predicated region
    $region70: #{tpu_custom_call.1} parent=1 // pred_check
      _
    $region71: #{tpu_custom_call.1} parent=1 // pred_check_branch
      %130 = sbr.rel (0) target = $region73
    $region72: #{tpu_custom_call.1} parent=1 // pred_region
      %131 = dma.done [#allocation6], 3072
    $region73: #{tpu_custom_call.1} parent=1 // pred_fallthru
      _
    // Predicated region
    $region74: #{tpu_custom_call.1} parent=1 // pred_check
      _
    $region75: #{tpu_custom_call.1} parent=1 // pred_check_branch
      %133 = sbr.rel (0) target = $region77
    $region76: #{tpu_custom_call.1} parent=1 // pred_region
      %134 = dma.done [#allocation9], 16
    $region77: #{tpu_custom_call.1} parent=1 // pred_fallthru
      _
    // Predicated region
    $region78: #{tpu_custom_call.1} parent=1 // pred_check
      _
    $region79: #{tpu_custom_call.1} parent=1 // pred_check_branch
      %136 = sbr.rel (0) target = $region81
    $region80: #{tpu_custom_call.1} parent=1 // pred_region
      %137 = dma.done [#allocation9], 6144
    $region81: #{tpu_custom_call.1} parent=1 // pred_fallthru
      _
    // Predicated region
    $region82: #{tpu_custom_call.1} parent=1 // pred_check
      _
    $region83: #{tpu_custom_call.1} parent=1 // pred_check_branch
      %139 = sbr.rel (0) target = $region85
    $region84: #{tpu_custom_call.1} parent=1 // pred_region
      %140 = dma.done [#allocation12], 12288
    $region85: #{tpu_custom_call.1} parent=1 // pred_fallthru
      _
    // Predicated region
    $region86: #{tpu_custom_call.1} parent=1 // pred_check
      _
    $region87: #{tpu_custom_call.1} parent=1 // pred_check_branch
      %142 = sbr.rel (0) target = $region89
    $region88: #{tpu_custom_call.1} parent=1 // pred_region
      %143 = dma.done [#allocation12], 12288
    $region89: #{tpu_custom_call.1} parent=1 // pred_fallthru
      _
    %v145 = vlaneseq
    %v146 = vshrl.u32 %v145, 7
    %v147 = vadd.s32 %v146, 8
    %vm148 = vcmp.ge.s32.totalorder %v146, 2
    %vm149 = vcmp.ge.s32.totalorder %v147, 2
    %vm150 = vcmp.lt.s32.totalorder %v146, 14
    %vm151 = vcmp.lt.s32.totalorder %v147, 14
    %v152 = vld [vmem:[#allocation2] sm:$0xff]
    %v153 = vld [vmem:[#allocation2 + $0x8] sm:$0xff]
    %v154 = vrot.slane %v152, 6
    %v155 = vrot.slane %v153, 6
    %vm156 = vcmp.lt.s32.totalorder %v146, 2
    %v157 = vsel %vm156, %v154, %v155
    %v158 = vsel %vm156, %v155, %v154
    %v159 = vsel %vm148, 1, 0
    %v160 = vsel %vm149, 1, 0
    %vm161 = vcmp.eq.s32.totalorder %v159, 1
    %vm162 = vcmp.eq.s32.totalorder %v160, 1
    %v163 = vsel %vm161, %v158, 0.0
    %v164 = vsel %vm162, %v157, 0.0
    %v165 = vrot.slane %v152, 2
    %v166 = vrot.slane %v153, 2
    %vm167 = vcmp.lt.s32.totalorder %v146, 6
    %v168 = vsel %vm167, %v165, %v166
    %v169 = vsel %vm167, %v166, %v165
    %v170 = vsel %vm150, 1, 0
    %v171 = vsel %vm151, 1, 0
    %vm172 = vcmp.eq.s32.totalorder %v170, 1
    %vm173 = vcmp.eq.s32.totalorder %v171, 1
    %v174 = vsel %vm172, %v168, 0.0
    %v175 = vsel %vm173, %v169, 0.0
    %v176 = vpack.c.bf16 %v164, %v163
    %v177 = vpack.c.bf16 %v153, %v152
    %v178 = vpack.c.bf16 %v175, %v174
    %v179 = vld [vmem:[#allocation5] sm:$0xf]
    %v180 = vld [vmem:[#allocation5 + $0x4] sm:$0xf]
    %v181 = vld [vmem:[#allocation5 + $0x8] sm:$0xf]
    %v182 = vld [vmem:[#allocation5 + $0xc] sm:$0xf]
    %v183 = vld [vmem:[#allocation5 + $0x10] sm:$0xf]
    %v184 = vld [vmem:[#allocation5 + $0x14] sm:$0xf]
    %v185 = vld [vmem:[#allocation5 + $0x18] sm:$0xf]
    %v186 = vld [vmem:[#allocation5 + $0x1c] sm:$0xf]
    %v187 = vld [vmem:[#allocation5 + $0x20] sm:$0xf]
    %v188 = vld [vmem:[#allocation5 + $0x24] sm:$0xf]
    %v189 = vld [vmem:[#allocation5 + $0x28] sm:$0xf]
    %v190 = vld [vmem:[#allocation5 + $0x2c] sm:$0xf]
    %v191 = vld [vmem:[#allocation5 + $0x30] sm:$0xf]
    %v192 = vld [vmem:[#allocation5 + $0x34] sm:$0xf]
    %v193 = vld [vmem:[#allocation5 + $0x38] sm:$0xf]
    %v194 = vld [vmem:[#allocation5 + $0x3c] sm:$0xf]
    %v195 = vld [vmem:[#allocation5 + $0x40] sm:$0xf]
    %v196 = vld [vmem:[#allocation5 + $0x44] sm:$0xf]
    %v197 = vld [vmem:[#allocation5 + $0x48] sm:$0xf]
    %v198 = vld [vmem:[#allocation5 + $0x4c] sm:$0xf]
    %v199 = vld [vmem:[#allocation5 + $0x50] sm:$0xf]
    %v200 = vld [vmem:[#allocation5 + $0x54] sm:$0xf]
    %v201 = vld [vmem:[#allocation5 + $0x58] sm:$0xf]
    %v202 = vld [vmem:[#allocation5 + $0x5c] sm:$0xf]
    %v203 = vld [vmem:[#allocation5 + $0x60] sm:$0xf]
    %v204 = vld [vmem:[#allocation5 + $0x64] sm:$0xf]
    %v205 = vld [vmem:[#allocation5 + $0x68] sm:$0xf]
    %v206 = vld [vmem:[#allocation5 + $0x6c] sm:$0xf]
    %v207 = vld [vmem:[#allocation5 + $0x70] sm:$0xf]
    %v208 = vld [vmem:[#allocation5 + $0x74] sm:$0xf]
    %v209 = vld [vmem:[#allocation5 + $0x78] sm:$0xf]
    %v210 = vld [vmem:[#allocation5 + $0x7c] sm:$0xf]
    %v211 = vld [vmem:[#allocation5 + $0x80] sm:$0xf]
    %v212 = vld [vmem:[#allocation5 + $0x84] sm:$0xf]
    %v213 = vld [vmem:[#allocation5 + $0x88] sm:$0xf]
    %v214 = vld [vmem:[#allocation5 + $0x8c] sm:$0xf]
    %v215 = vld [vmem:[#allocation5 + $0x90] sm:$0xf]
    %v216 = vld [vmem:[#allocation5 + $0x94] sm:$0xf]
    %v217 = vld [vmem:[#allocation5 + $0x98] sm:$0xf]
    %v218 = vld [vmem:[#allocation5 + $0x9c] sm:$0xf]
    %v219 = vld [vmem:[#allocation5 + $0xa0] sm:$0xf]
    %v220 = vld [vmem:[#allocation5 + $0xa4] sm:$0xf]
    %v221 = vld [vmem:[#allocation5 + $0xa8] sm:$0xf]
    %v222 = vld [vmem:[#allocation5 + $0xac] sm:$0xf]
    %v223 = vld [vmem:[#allocation5 + $0xb0] sm:$0xf]
    %v224 = vld [vmem:[#allocation5 + $0xb4] sm:$0xf]
    %v225 = vld [vmem:[#allocation5 + $0xb8] sm:$0xf]
    %v226 = vld [vmem:[#allocation5 + $0xbc] sm:$0xf]
    %v227 = vld [vmem:[%s2] sm:$0x1]
    %v229 = vlaneseq
    %v230 = vshrl.u32 %v229, 7
    %v231 = vsub.s32 0, %v230
    %v232 = vrot.slane %v227, %v231
    %v282 = vunpack.c.l.b16 %v179
    %v283 = vunpack.c.l.b16 %v180
    %v284 = vunpack.c.l.b16 %v181
    %v285 = vunpack.c.l.b16 %v182
    %v286 = vunpack.c.l.b16 %v183
    %v287 = vunpack.c.l.b16 %v184
    %v288 = vunpack.c.l.b16 %v185
    %v289 = vunpack.c.l.b16 %v186
    %v290 = vunpack.c.l.b16 %v187
    %v291 = vunpack.c.l.b16 %v188
    %v292 = vunpack.c.l.b16 %v189
    %v293 = vunpack.c.l.b16 %v190
    %v294 = vunpack.c.l.b16 %v191
    %v295 = vunpack.c.l.b16 %v192
    %v296 = vunpack.c.l.b16 %v193
    %v297 = vunpack.c.l.b16 %v194
    %v298 = vunpack.c.l.b16 %v195
    %v299 = vunpack.c.l.b16 %v196
    %v300 = vunpack.c.l.b16 %v197
    %v301 = vunpack.c.l.b16 %v198
    %v302 = vunpack.c.l.b16 %v199
    %v303 = vunpack.c.l.b16 %v200
    %v304 = vunpack.c.l.b16 %v201
    %v305 = vunpack.c.l.b16 %v202
    %v306 = vunpack.c.l.b16 %v203
    %v307 = vunpack.c.l.b16 %v204
    %v308 = vunpack.c.l.b16 %v205
    %v309 = vunpack.c.l.b16 %v206
    %v310 = vunpack.c.l.b16 %v207
    %v311 = vunpack.c.l.b16 %v208
    %v312 = vunpack.c.l.b16 %v209
    %v313 = vunpack.c.l.b16 %v210
    %v314 = vunpack.c.l.b16 %v211
    %v315 = vunpack.c.l.b16 %v212
    %v316 = vunpack.c.l.b16 %v213
    %v317 = vunpack.c.l.b16 %v214
    %v318 = vunpack.c.l.b16 %v215
    %v319 = vunpack.c.l.b16 %v216
    %v320 = vunpack.c.l.b16 %v217
    %v321 = vunpack.c.l.b16 %v218
    %v322 = vunpack.c.l.b16 %v219
    %v323 = vunpack.c.l.b16 %v220
    %v324 = vunpack.c.l.b16 %v221
    %v325 = vunpack.c.l.b16 %v222
    %v326 = vunpack.c.l.b16 %v223
    %v327 = vunpack.c.l.b16 %v224
    %v328 = vunpack.c.l.b16 %v225
    %v329 = vunpack.c.l.b16 %v226
    %v330 = vpack.c.b16 %v283, %v282
    %v331 = vpack.c.b16 %v285, %v284
    %v332 = vpack.c.b16 %v287, %v286
    %v333 = vpack.c.b16 %v289, %v288
    %v334 = vpack.c.b16 %v291, %v290
    %v335 = vpack.c.b16 %v293, %v292
    %v336 = vpack.c.b16 %v295, %v294
    %v337 = vpack.c.b16 %v297, %v296
    %v338 = vpack.c.b16 %v299, %v298
    %v339 = vpack.c.b16 %v301, %v300
    %v340 = vpack.c.b16 %v303, %v302
    %v341 = vpack.c.b16 %v305, %v304
    %v342 = vpack.c.b16 %v307, %v306
    %v343 = vpack.c.b16 %v309, %v308
    %v344 = vpack.c.b16 %v311, %v310
    %v345 = vpack.c.b16 %v313, %v312
    %v346 = vpack.c.b16 %v315, %v314
    %v347 = vpack.c.b16 %v317, %v316
    %v348 = vpack.c.b16 %v319, %v318
    %v349 = vpack.c.b16 %v321, %v320
    %v350 = vpack.c.b16 %v323, %v322
    %v351 = vpack.c.b16 %v325, %v324
    %v352 = vpack.c.b16 %v327, %v326
    %v353 = vpack.c.b16 %v329, %v328
    %378 = vmatprep.subr.bf16.mxu0 0
    %379 = vmatpush1.bf16.msra.mxu0 %v330
    %380 = vmatprep.subr.bf16.mxu0 0
    %381 = vmatpush1.bf16.msra.mxu0 %v331
    %382 = vmatprep.subr.bf16.mxu0 0
    %383 = vmatpush1.bf16.msra.mxu0 %v332
    %384 = vmatprep.subr.bf16.mxu0 0
    %385 = vmatpush1.bf16.msra.mxu0 %v333
    %386 = vmatprep.subr.bf16.mxu0 0
    %387 = vmatpush1.bf16.msra.mxu0 %v334
    %388 = vmatprep.subr.bf16.mxu0 0
    %389 = vmatpush1.bf16.msra.mxu0 %v335
    %390 = vmatprep.subr.bf16.mxu0 0
    %391 = vmatpush1.bf16.msra.mxu0 %v336
    %392 = vmatprep.subr.bf16.mxu0 0
    %393 = vmatpush1.bf16.msra.mxu0 %v337
    %394 = vmatprep.subr.bf16.mxu0 0
    %395 = vmatpush1.bf16.msra.mxu0 %v338
    %396 = vmatprep.subr.bf16.mxu0 0
    %397 = vmatpush1.bf16.msra.mxu0 %v339
    %398 = vmatprep.subr.bf16.mxu0 0
    %399 = vmatpush1.bf16.msra.mxu0 %v340
    %400 = vmatprep.subr.bf16.mxu0 0
    %401 = vmatpush1.bf16.msra.mxu0 %v341
    %402 = vmatprep.subr.bf16.mxu0 0
    %403 = vmatpush1.bf16.msra.mxu0 %v342
    %404 = vmatprep.subr.bf16.mxu0 0
    %405 = vmatpush1.bf16.msra.mxu0 %v343
    %406 = vmatprep.subr.bf16.mxu0 0
    %407 = vmatpush1.bf16.msra.mxu0 %v344
    %408 = vmatprep.subr.bf16.mxu0 0
    %409 = vmatpush1.bf16.msra.mxu0 %v345
    %410 = vmatprep.mubr.bf16.mxu0 %v177
    %411 = vmatmul.mubr.bf16.gmra.mrb[0].mxu0 %v176
    %v412 = vpop.f32.mrb[0].mxu0
    %v413 = vadd.f32 %v232, %v412
    %v414 = vpop.f32.mrb[0].mxu0
    %v415 = vpop.f32.mrb[0].mxu0
    %v416 = vadd.f32 %v232, %v415
    %v417 = vpop.f32.mrb[0].mxu0
    %418 = vdwg.mxu0
    %419 = vmatprep.subr.bf16.mxu0 0
    %420 = vmatpush1.bf16.msra.mxu0 %v346
    %421 = vmatprep.subr.bf16.mxu0 0
    %422 = vmatpush1.bf16.msra.mxu0 %v347
    %423 = vmatprep.subr.bf16.mxu0 0
    %424 = vmatpush1.bf16.msra.mxu0 %v348
    %425 = vmatprep.subr.bf16.mxu0 0
    %426 = vmatpush1.bf16.msra.mxu0 %v349
    %427 = vmatprep.subr.bf16.mxu0 0
    %428 = vmatpush1.bf16.msra.mxu0 %v350
    %429 = vmatprep.subr.bf16.mxu0 0
    %430 = vmatpush1.bf16.msra.mxu0 %v351
    %431 = vmatprep.subr.bf16.mxu0 0
    %432 = vmatpush1.bf16.msra.mxu0 %v352
    %433 = vmatprep.subr.bf16.mxu0 0
    %434 = vmatpush1.bf16.msra.mxu0 %v353
    %435 = vmatprep.subr.bf16.mxu0 0
    %436 = vmatpush1.bf16.msra.mxu0 0
    %437 = vmatprep.subr.bf16.mxu0 0
    %438 = vmatpush1.bf16.msra.mxu0 0
    %439 = vmatprep.subr.bf16.mxu0 0
    %440 = vmatpush1.bf16.msra.mxu0 0
    %441 = vmatprep.subr.bf16.mxu0 0
    %442 = vmatpush1.bf16.msra.mxu0 0
    %443 = vmatprep.subr.bf16.mxu0 0
    %444 = vmatpush1.bf16.msra.mxu0 0
    %445 = vmatprep.subr.bf16.mxu0 0
    %446 = vmatpush1.bf16.msra.mxu0 0
    %447 = vmatprep.subr.bf16.mxu0 0
    %448 = vmatpush1.bf16.msra.mxu0 0
    %449 = vmatprep.subr.bf16.mxu0 0
    %450 = vmatpush1.bf16.msra.mxu0 0
    %451 = vmatprep.mubr.bf16.mxu0 0
    %452 = vmatmul.mubr.bf16.gmra.mrb[0].mxu0 %v178
    %v453 = vpop.f32.mrb[0].mxu0
    %v454 = vadd.f32 %v413, %v453
    %v455 = vpop.f32.mrb[0].mxu0
    %v456 = vpop.f32.mrb[0].mxu0
    %v457 = vadd.f32 %v416, %v456
    %v458 = vpop.f32.mrb[0].mxu0
    %459 = vdwg.mxu0
    %v460 = vmax.f32 %v454, 0.0
    %v461 = vmax.f32 %v457, 0.0
    %v462 = vrot.slane %v460, 6
    %v463 = vrot.slane %v461, 6
    %v464 = vsel %vm156, %v462, %v463
    %v465 = vsel %vm156, %v463, %v462
    %v466 = vsel %vm161, %v465, 0.0
    %v467 = vsel %vm162, %v464, 0.0
    %v468 = vrot.slane %v460, 2
    %v469 = vrot.slane %v461, 2
    %v470 = vsel %vm167, %v468, %v469
    %v471 = vsel %vm167, %v469, %v468
    %v472 = vsel %vm172, %v470, 0.0
    %v473 = vsel %vm173, %v471, 0.0
    %v474 = vpack.c.bf16 %v467, %v466
    %v475 = vpack.c.bf16 %v461, %v460
    %v476 = vpack.c.bf16 %v473, %v472
    %v477 = vld [vmem:[#allocation7] sm:$0xf]
    %v478 = vld [vmem:[#allocation7 + $0x4] sm:$0xf]
    %v479 = vld [vmem:[#allocation7 + $0x8] sm:$0xf]
    %v480 = vld [vmem:[#allocation7 + $0xc] sm:$0xf]
    %v481 = vld [vmem:[#allocation7 + $0x10] sm:$0xf]
    %v482 = vld [vmem:[#allocation7 + $0x14] sm:$0xf]
    %v483 = vld [vmem:[#allocation7 + $0x18] sm:$0xf]
    %v484 = vld [vmem:[#allocation7 + $0x1c] sm:$0xf]
    %v485 = vld [vmem:[#allocation7 + $0x20] sm:$0xf]
    %v486 = vld [vmem:[#allocation7 + $0x24] sm:$0xf]
    %v487 = vld [vmem:[#allocation7 + $0x28] sm:$0xf]
    %v488 = vld [vmem:[#allocation7 + $0x2c] sm:$0xf]
    %v489 = vld [vmem:[#allocation7 + $0x30] sm:$0xf]
    %v490 = vld [vmem:[#allocation7 + $0x34] sm:$0xf]
    %v491 = vld [vmem:[#allocation7 + $0x38] sm:$0xf]
    %v492 = vld [vmem:[#allocation7 + $0x3c] sm:$0xf]
    %v493 = vld [vmem:[#allocation7 + $0x40] sm:$0xf]
    %v494 = vld [vmem:[#allocation7 + $0x44] sm:$0xf]
    %v495 = vld [vmem:[#allocation7 + $0x48] sm:$0xf]
    %v496 = vld [vmem:[#allocation7 + $0x4c] sm:$0xf]
    %v497 = vld [vmem:[#allocation7 + $0x50] sm:$0xf]
    %v498 = vld [vmem:[#allocation7 + $0x54] sm:$0xf]
    %v499 = vld [vmem:[#allocation7 + $0x58] sm:$0xf]
    %v500 = vld [vmem:[#allocation7 + $0x5c] sm:$0xf]
    %v501 = vld [vmem:[#allocation7 + $0x60] sm:$0xf]
    %v502 = vld [vmem:[#allocation7 + $0x64] sm:$0xf]
    %v503 = vld [vmem:[#allocation7 + $0x68] sm:$0xf]
    %v504 = vld [vmem:[#allocation7 + $0x6c] sm:$0xf]
    %v505 = vld [vmem:[#allocation7 + $0x70] sm:$0xf]
    %v506 = vld [vmem:[#allocation7 + $0x74] sm:$0xf]
    %v507 = vld [vmem:[#allocation7 + $0x78] sm:$0xf]
    %v508 = vld [vmem:[#allocation7 + $0x7c] sm:$0xf]
    %v509 = vld [vmem:[#allocation7 + $0x80] sm:$0xf]
    %v510 = vld [vmem:[#allocation7 + $0x84] sm:$0xf]
    %v511 = vld [vmem:[#allocation7 + $0x88] sm:$0xf]
    %v512 = vld [vmem:[#allocation7 + $0x8c] sm:$0xf]
    %v513 = vld [vmem:[#allocation7 + $0x90] sm:$0xf]
    %v514 = vld [vmem:[#allocation7 + $0x94] sm:$0xf]
    %v515 = vld [vmem:[#allocation7 + $0x98] sm:$0xf]
    %v516 = vld [vmem:[#allocation7 + $0x9c] sm:$0xf]
    %v517 = vld [vmem:[#allocation7 + $0xa0] sm:$0xf]
    %v518 = vld [vmem:[#allocation7 + $0xa4] sm:$0xf]
    %v519 = vld [vmem:[#allocation7 + $0xa8] sm:$0xf]
    %v520 = vld [vmem:[#allocation7 + $0xac] sm:$0xf]
    %v521 = vld [vmem:[#allocation7 + $0xb0] sm:$0xf]
    %v522 = vld [vmem:[#allocation7 + $0xb4] sm:$0xf]
    %v523 = vld [vmem:[#allocation7 + $0xb8] sm:$0xf]
    %v524 = vld [vmem:[#allocation7 + $0xbc] sm:$0xf]
    %v525 = vld [vmem:[#allocation8] sm:$0x1]
    %v527 = vlaneseq
    %v528 = vshrl.u32 %v527, 7
    %v529 = vsub.s32 0, %v528
    %v530 = vrot.slane %v525, %v529
    %v580 = vunpack.c.l.b16 %v477
    %v581 = vunpack.c.l.b16 %v478
    %v582 = vunpack.c.l.b16 %v479
    %v583 = vunpack.c.l.b16 %v480
    %v584 = vunpack.c.l.b16 %v481
    %v585 = vunpack.c.l.b16 %v482
    %v586 = vunpack.c.l.b16 %v483
    %v587 = vunpack.c.l.b16 %v484
    %v588 = vunpack.c.l.b16 %v485
    %v589 = vunpack.c.l.b16 %v486
    %v590 = vunpack.c.l.b16 %v487
    %v591 = vunpack.c.l.b16 %v488
    %v592 = vunpack.c.l.b16 %v489
    %v593 = vunpack.c.l.b16 %v490
    %v594 = vunpack.c.l.b16 %v491
    %v595 = vunpack.c.l.b16 %v492
    %v596 = vunpack.c.l.b16 %v493
    %v597 = vunpack.c.l.b16 %v494
    %v598 = vunpack.c.l.b16 %v495
    %v599 = vunpack.c.l.b16 %v496
    %v600 = vunpack.c.l.b16 %v497
    %v601 = vunpack.c.l.b16 %v498
    %v602 = vunpack.c.l.b16 %v499
    %v603 = vunpack.c.l.b16 %v500
    %v604 = vunpack.c.l.b16 %v501
    %v605 = vunpack.c.l.b16 %v502
    %v606 = vunpack.c.l.b16 %v503
    %v607 = vunpack.c.l.b16 %v504
    %v608 = vunpack.c.l.b16 %v505
    %v609 = vunpack.c.l.b16 %v506
    %v610 = vunpack.c.l.b16 %v507
    %v611 = vunpack.c.l.b16 %v508
    %v612 = vunpack.c.l.b16 %v509
    %v613 = vunpack.c.l.b16 %v510
    %v614 = vunpack.c.l.b16 %v511
    %v615 = vunpack.c.l.b16 %v512
    %v616 = vunpack.c.l.b16 %v513
    %v617 = vunpack.c.l.b16 %v514
    %v618 = vunpack.c.l.b16 %v515
    %v619 = vunpack.c.l.b16 %v516
    %v620 = vunpack.c.l.b16 %v517
    %v621 = vunpack.c.l.b16 %v518
    %v622 = vunpack.c.l.b16 %v519
    %v623 = vunpack.c.l.b16 %v520
    %v624 = vunpack.c.l.b16 %v521
    %v625 = vunpack.c.l.b16 %v522
    %v626 = vunpack.c.l.b16 %v523
    %v627 = vunpack.c.l.b16 %v524
    %v628 = vpack.c.b16 %v581, %v580
    %v629 = vpack.c.b16 %v583, %v582
    %v630 = vpack.c.b16 %v585, %v584
    %v631 = vpack.c.b16 %v587, %v586
    %v632 = vpack.c.b16 %v589, %v588
    %v633 = vpack.c.b16 %v591, %v590
    %v634 = vpack.c.b16 %v593, %v592
    %v635 = vpack.c.b16 %v595, %v594
    %v636 = vpack.c.b16 %v597, %v596
    %v637 = vpack.c.b16 %v599, %v598
    %v638 = vpack.c.b16 %v601, %v600
    %v639 = vpack.c.b16 %v603, %v602
    %v640 = vpack.c.b16 %v605, %v604
    %v641 = vpack.c.b16 %v607, %v606
    %v642 = vpack.c.b16 %v609, %v608
    %v643 = vpack.c.b16 %v611, %v610
    %v644 = vpack.c.b16 %v613, %v612
    %v645 = vpack.c.b16 %v615, %v614
    %v646 = vpack.c.b16 %v617, %v616
    %v647 = vpack.c.b16 %v619, %v618
    %v648 = vpack.c.b16 %v621, %v620
    %v649 = vpack.c.b16 %v623, %v622
    %v650 = vpack.c.b16 %v625, %v624
    %v651 = vpack.c.b16 %v627, %v626
    %676 = vmatprep.subr.bf16.mxu0 0
    %677 = vmatpush1.bf16.msra.mxu0 %v628
    %678 = vmatprep.subr.bf16.mxu0 0
    %679 = vmatpush1.bf16.msra.mxu0 %v629
    %680 = vmatprep.subr.bf16.mxu0 0
    %681 = vmatpush1.bf16.msra.mxu0 %v630
    %682 = vmatprep.subr.bf16.mxu0 0
    %683 = vmatpush1.bf16.msra.mxu0 %v631
    %684 = vmatprep.subr.bf16.mxu0 0
    %685 = vmatpush1.bf16.msra.mxu0 %v632
    %686 = vmatprep.subr.bf16.mxu0 0
    %687 = vmatpush1.bf16.msra.mxu0 %v633
    %688 = vmatprep.subr.bf16.mxu0 0
    %689 = vmatpush1.bf16.msra.mxu0 %v634
    %690 = vmatprep.subr.bf16.mxu0 0
    %691 = vmatpush1.bf16.msra.mxu0 %v635
    %692 = vmatprep.subr.bf16.mxu0 0
    %693 = vmatpush1.bf16.msra.mxu0 %v636
    %694 = vmatprep.subr.bf16.mxu0 0
    %695 = vmatpush1.bf16.msra.mxu0 %v637
    %696 = vmatprep.subr.bf16.mxu0 0
    %697 = vmatpush1.bf16.msra.mxu0 %v638
    %698 = vmatprep.subr.bf16.mxu0 0
    %699 = vmatpush1.bf16.msra.mxu0 %v639
    %700 = vmatprep.subr.bf16.mxu0 0
    %701 = vmatpush1.bf16.msra.mxu0 %v640
    %702 = vmatprep.subr.bf16.mxu0 0
    %703 = vmatpush1.bf16.msra.mxu0 %v641
    %704 = vmatprep.subr.bf16.mxu0 0
    %705 = vmatpush1.bf16.msra.mxu0 %v642
    %706 = vmatprep.subr.bf16.mxu0 0
    %707 = vmatpush1.bf16.msra.mxu0 %v643
    %708 = vmatprep.mubr.bf16.mxu0 %v475
    %709 = vmatmul.mubr.bf16.gmra.mrb[0].mxu0 %v474
    %v710 = vpop.f32.mrb[0].mxu0
    %v711 = vadd.f32 %v530, %v710
    %v712 = vpop.f32.mrb[0].mxu0
    %v713 = vpop.f32.mrb[0].mxu0
    %v714 = vadd.f32 %v530, %v713
    %v715 = vpop.f32.mrb[0].mxu0
    %716 = vdwg.mxu0
    %717 = vmatprep.subr.bf16.mxu0 0
    %718 = vmatpush1.bf16.msra.mxu0 %v644
    %719 = vmatprep.subr.bf16.mxu0 0
    %720 = vmatpush1.bf16.msra.mxu0 %v645
    %721 = vmatprep.subr.bf16.mxu0 0
    %722 = vmatpush1.bf16.msra.mxu0 %v646
    %723 = vmatprep.subr.bf16.mxu0 0
    %724 = vmatpush1.bf16.msra.mxu0 %v647
    %725 = vmatprep.subr.bf16.mxu0 0
    %726 = vmatpush1.bf16.msra.mxu0 %v648
    %727 = vmatprep.subr.bf16.mxu0 0
    %728 = vmatpush1.bf16.msra.mxu0 %v649
    %729 = vmatprep.subr.bf16.mxu0 0
    %730 = vmatpush1.bf16.msra.mxu0 %v650
    %731 = vmatprep.subr.bf16.mxu0 0
    %732 = vmatpush1.bf16.msra.mxu0 %v651
    %733 = vmatprep.subr.bf16.mxu0 0
    %734 = vmatpush1.bf16.msra.mxu0 0
    %735 = vmatprep.subr.bf16.mxu0 0
    %736 = vmatpush1.bf16.msra.mxu0 0
    %737 = vmatprep.subr.bf16.mxu0 0
    %738 = vmatpush1.bf16.msra.mxu0 0
    %739 = vmatprep.subr.bf16.mxu0 0
    %740 = vmatpush1.bf16.msra.mxu0 0
    %741 = vmatprep.subr.bf16.mxu0 0
    %742 = vmatpush1.bf16.msra.mxu0 0
    %743 = vmatprep.subr.bf16.mxu0 0
    %744 = vmatpush1.bf16.msra.mxu0 0
    %745 = vmatprep.subr.bf16.mxu0 0
    %746 = vmatpush1.bf16.msra.mxu0 0
    %747 = vmatprep.subr.bf16.mxu0 0
    %748 = vmatpush1.bf16.msra.mxu0 0
    %749 = vmatprep.mubr.bf16.mxu0 0
    %750 = vmatmul.mubr.bf16.gmra.mrb[0].mxu0 %v476
    %v751 = vpop.f32.mrb[0].mxu0
    %v752 = vadd.f32 %v711, %v751
    %v753 = vpop.f32.mrb[0].mxu0
    %v754 = vpop.f32.mrb[0].mxu0
    %v755 = vadd.f32 %v714, %v754
    %v756 = vpop.f32.mrb[0].mxu0
    %757 = vdwg.mxu0
    %v758 = vmax.f32 %v752, 0.0
    %v759 = vmax.f32 %v755, 0.0
    %v760 = vadd.f32 %v758, %v759
    %v761 = vrot.slane %v760, 4
    %v762 = vadd.f32 %v760, %v761
    %v763 = vrot.slane %v762, 2
    %v764 = vadd.f32 %v762, %v763
    %v765 = vrot.slane %v764, 1
    %v766 = vadd.f32 %v764, %v765
    %v767 = vmul.f32 %v758, %v758
    %v768 = vmul.f32 %v759, %v759
    %v769 = vadd.f32 %v767, %v768
    %v770 = vrot.slane %v769, 4
    %v771 = vadd.f32 %v769, %v770
    %v772 = vrot.slane %v771, 2
    %v773 = vadd.f32 %v771, %v772
    %v774 = vrot.slane %v773, 1
    %v775 = vadd.f32 %v773, %v774
    %v776 = vmul.f32 %v766, 0.0625
    %v777 = vmul.f32 %v775, 0.0625
    %v778 = vmul.f32 %v776, %v776
    %v779 = vsub.f32 %v777, %v778
    %v780 = vadd.f32 %v779, 1e-05
    %v781 = vrsqrt.pop %v780
    %v782 = vsub.f32 %v758, %v776
    %v783 = vsub.f32 %v759, %v776
    %v784 = vmul.f32 %v782, %v781
    %v785 = vmul.f32 %v783, %v781
    %v786 = vld [vmem:[%s5] sm:$0x1]
    %v788 = vlaneseq
    %v789 = vshrl.u32 %v788, 7
    %v790 = vsub.s32 0, %v789
    %v791 = vrot.slane %v786, %v790
    %v793 = vmul.f32 %v784, %v791
    %v794 = vmul.f32 %v785, %v791
    %v795 = vld [vmem:[%s6] sm:$0x1]
    %v797 = vlaneseq
    %v798 = vshrl.u32 %v797, 7
    %v799 = vsub.s32 0, %v798
    %v800 = vrot.slane %v795, %v799
    %v802 = vadd.f32 %v793, %v800
    %v803 = vadd.f32 %v794, %v800
    %v804 = vrot.slane %v802, 6
    %v805 = vrot.slane %v803, 6
    %v806 = vsel %vm156, %v804, %v805
    %v807 = vsel %vm156, %v805, %v804
    %v808 = vsel %vm161, %v807, 0.0
    %v809 = vsel %vm162, %v806, 0.0
    %v810 = vrot.slane %v802, 2
    %v811 = vrot.slane %v803, 2
    %v812 = vsel %vm167, %v810, %v811
    %v813 = vsel %vm167, %v811, %v810
    %v814 = vsel %vm172, %v812, 0.0
    %v815 = vsel %vm173, %v813, 0.0
    %v816 = vpack.c.bf16 %v809, %v808
    %v817 = vpack.c.bf16 %v803, %v802
    %v818 = vpack.c.bf16 %v815, %v814
    %v819 = vld [vmem:[#allocation10] sm:$0xff]
    %v820 = vld [vmem:[#allocation10 + $0x8] sm:$0xff]
    %v821 = vld [vmem:[#allocation10 + $0x10] sm:$0xff]
    %v822 = vld [vmem:[#allocation10 + $0x18] sm:$0xff]
    %v823 = vld [vmem:[#allocation10 + $0x20] sm:$0xff]
    %v824 = vld [vmem:[#allocation10 + $0x28] sm:$0xff]
    %v825 = vld [vmem:[#allocation10 + $0x30] sm:$0xff]
    %v826 = vld [vmem:[#allocation10 + $0x38] sm:$0xff]
    %v827 = vld [vmem:[#allocation10 + $0x40] sm:$0xff]
    %v828 = vld [vmem:[#allocation10 + $0x48] sm:$0xff]
    %v829 = vld [vmem:[#allocation10 + $0x50] sm:$0xff]
    %v830 = vld [vmem:[#allocation10 + $0x58] sm:$0xff]
    %v831 = vld [vmem:[#allocation10 + $0x60] sm:$0xff]
    %v832 = vld [vmem:[#allocation10 + $0x68] sm:$0xff]
    %v833 = vld [vmem:[#allocation10 + $0x70] sm:$0xff]
    %v834 = vld [vmem:[#allocation10 + $0x78] sm:$0xff]
    %v835 = vld [vmem:[#allocation10 + $0x80] sm:$0xff]
    %v836 = vld [vmem:[#allocation10 + $0x88] sm:$0xff]
    %v837 = vld [vmem:[#allocation10 + $0x90] sm:$0xff]
    %v838 = vld [vmem:[#allocation10 + $0x98] sm:$0xff]
    %v839 = vld [vmem:[#allocation10 + $0xa0] sm:$0xff]
    %v840 = vld [vmem:[#allocation10 + $0xa8] sm:$0xff]
    %v841 = vld [vmem:[#allocation10 + $0xb0] sm:$0xff]
    %v842 = vld [vmem:[#allocation10 + $0xb8] sm:$0xff]
    %v843 = vld [vmem:[#allocation10 + $0xc0] sm:$0xff]
    %v844 = vld [vmem:[#allocation10 + $0xc8] sm:$0xff]
    %v845 = vld [vmem:[#allocation10 + $0xd0] sm:$0xff]
    %v846 = vld [vmem:[#allocation10 + $0xd8] sm:$0xff]
    %v847 = vld [vmem:[#allocation10 + $0xe0] sm:$0xff]
    %v848 = vld [vmem:[#allocation10 + $0xe8] sm:$0xff]
    %v849 = vld [vmem:[#allocation10 + $0xf0] sm:$0xff]
    %v850 = vld [vmem:[#allocation10 + $0xf8] sm:$0xff]
    %v851 = vld [vmem:[#allocation10 + $0x100] sm:$0xff]
    %v852 = vld [vmem:[#allocation10 + $0x108] sm:$0xff]
    %v853 = vld [vmem:[#allocation10 + $0x110] sm:$0xff]
    %v854 = vld [vmem:[#allocation10 + $0x118] sm:$0xff]
    %v855 = vld [vmem:[#allocation10 + $0x120] sm:$0xff]
    %v856 = vld [vmem:[#allocation10 + $0x128] sm:$0xff]
    %v857 = vld [vmem:[#allocation10 + $0x130] sm:$0xff]
    %v858 = vld [vmem:[#allocation10 + $0x138] sm:$0xff]
    %v859 = vld [vmem:[#allocation10 + $0x140] sm:$0xff]
    %v860 = vld [vmem:[#allocation10 + $0x148] sm:$0xff]
    %v861 = vld [vmem:[#allocation10 + $0x150] sm:$0xff]
    %v862 = vld [vmem:[#allocation10 + $0x158] sm:$0xff]
    %v863 = vld [vmem:[#allocation10 + $0x160] sm:$0xff]
    %v864 = vld [vmem:[#allocation10 + $0x168] sm:$0xff]
    %v865 = vld [vmem:[#allocation10 + $0x170] sm:$0xff]
    %v866 = vld [vmem:[#allocation10 + $0x178] sm:$0xff]
    %v867 = vld [vmem:[%s8] sm:$0x3]
    %v869 = vlaneseq
    %v870 = vshrl.u32 %v869, 7
    %v871 = vsub.s32 0, %v870
    %v872 = vrot.slane %v867, %v871
    %v873 = vlaneseq
    %v874 = vshrl.u32 %v873, 7
    %v875 = vsub.s32 1, %v874
    %v876 = vrot.slane %v867, %v875
    %v927 = vunpack.c.l.b16 %v819
    %v928 = vunpack.c.h.b16 %v819
    %v929 = vunpack.c.l.b16 %v820
    %v930 = vunpack.c.h.b16 %v820
    %v931 = vunpack.c.l.b16 %v821
    %v932 = vunpack.c.h.b16 %v821
    %v933 = vunpack.c.l.b16 %v822
    %v934 = vunpack.c.h.b16 %v822
    %v935 = vunpack.c.l.b16 %v823
    %v936 = vunpack.c.h.b16 %v823
    %v937 = vunpack.c.l.b16 %v824
    %v938 = vunpack.c.h.b16 %v824
    %v939 = vunpack.c.l.b16 %v825
    %v940 = vunpack.c.h.b16 %v825
    %v941 = vunpack.c.l.b16 %v826
    %v942 = vunpack.c.h.b16 %v826
    %v943 = vunpack.c.l.b16 %v827
    %v944 = vunpack.c.h.b16 %v827
    %v945 = vunpack.c.l.b16 %v828
    %v946 = vunpack.c.h.b16 %v828
    %v947 = vunpack.c.l.b16 %v829
    %v948 = vunpack.c.h.b16 %v829
    %v949 = vunpack.c.l.b16 %v830
    %v950 = vunpack.c.h.b16 %v830
    %v951 = vunpack.c.l.b16 %v831
    %v952 = vunpack.c.h.b16 %v831
    %v953 = vunpack.c.l.b16 %v832
    %v954 = vunpack.c.h.b16 %v832
    %v955 = vunpack.c.l.b16 %v833
    %v956 = vunpack.c.h.b16 %v833
    %v957 = vunpack.c.l.b16 %v834
    %v958 = vunpack.c.h.b16 %v834
    %v959 = vunpack.c.l.b16 %v835
    %v960 = vunpack.c.h.b16 %v835
    %v961 = vunpack.c.l.b16 %v836
    %v962 = vunpack.c.h.b16 %v836
    %v963 = vunpack.c.l.b16 %v837
    %v964 = vunpack.c.h.b16 %v837
    %v965 = vunpack.c.l.b16 %v838
    %v966 = vunpack.c.h.b16 %v838
    %v967 = vunpack.c.l.b16 %v839
    %v968 = vunpack.c.h.b16 %v839
    %v969 = vunpack.c.l.b16 %v840
    %v970 = vunpack.c.h.b16 %v840
    %v971 = vunpack.c.l.b16 %v841
    %v972 = vunpack.c.h.b16 %v841
    %v973 = vunpack.c.l.b16 %v842
    %v974 = vunpack.c.h.b16 %v842
    %v975 = vunpack.c.l.b16 %v843
    %v976 = vunpack.c.h.b16 %v843
    %v977 = vunpack.c.l.b16 %v844
    %v978 = vunpack.c.h.b16 %v844
    %v979 = vunpack.c.l.b16 %v845
    %v980 = vunpack.c.h.b16 %v845
    %v981 = vunpack.c.l.b16 %v846
    %v982 = vunpack.c.h.b16 %v846
    %v983 = vunpack.c.l.b16 %v847
    %v984 = vunpack.c.h.b16 %v847
    %v985 = vunpack.c.l.b16 %v848
    %v986 = vunpack.c.h.b16 %v848
    %v987 = vunpack.c.l.b16 %v849
    %v988 = vunpack.c.h.b16 %v849
    %v989 = vunpack.c.l.b16 %v850
    %v990 = vunpack.c.h.b16 %v850
    %v991 = vunpack.c.l.b16 %v851
    %v992 = vunpack.c.h.b16 %v851
    %v993 = vunpack.c.l.b16 %v852
    %v994 = vunpack.c.h.b16 %v852
    %v995 = vunpack.c.l.b16 %v853
    %v996 = vunpack.c.h.b16 %v853
    %v997 = vunpack.c.l.b16 %v854
    %v998 = vunpack.c.h.b16 %v854
    %v999 = vunpack.c.l.b16 %v855
    %v1000 = vunpack.c.h.b16 %v855
    %v1001 = vunpack.c.l.b16 %v856
    %v1002 = vunpack.c.h.b16 %v856
    %v1003 = vunpack.c.l.b16 %v857
    %v1004 = vunpack.c.h.b16 %v857
    %v1005 = vunpack.c.l.b16 %v858
    %v1006 = vunpack.c.h.b16 %v858
    %v1007 = vunpack.c.l.b16 %v859
    %v1008 = vunpack.c.h.b16 %v859
    %v1009 = vunpack.c.l.b16 %v860
    %v1010 = vunpack.c.h.b16 %v860
    %v1011 = vunpack.c.l.b16 %v861
    %v1012 = vunpack.c.h.b16 %v861
    %v1013 = vunpack.c.l.b16 %v862
    %v1014 = vunpack.c.h.b16 %v862
    %v1015 = vunpack.c.l.b16 %v863
    %v1016 = vunpack.c.h.b16 %v863
    %v1017 = vunpack.c.l.b16 %v864
    %v1018 = vunpack.c.h.b16 %v864
    %v1019 = vunpack.c.l.b16 %v865
    %v1020 = vunpack.c.h.b16 %v865
    %v1021 = vunpack.c.l.b16 %v866
    %v1022 = vunpack.c.h.b16 %v866
    %v1023 = vpack.c.b16 %v929, %v927
    %v1024 = vpack.c.b16 %v930, %v928
    %v1025 = vpack.c.b16 %v933, %v931
    %v1026 = vpack.c.b16 %v934, %v932
    %v1027 = vpack.c.b16 %v937, %v935
    %v1028 = vpack.c.b16 %v938, %v936
    %v1029 = vpack.c.b16 %v941, %v939
    %v1030 = vpack.c.b16 %v942, %v940
    %v1031 = vpack.c.b16 %v945, %v943
    %v1032 = vpack.c.b16 %v946, %v944
    %v1033 = vpack.c.b16 %v949, %v947
    %v1034 = vpack.c.b16 %v950, %v948
    %v1035 = vpack.c.b16 %v953, %v951
    %v1036 = vpack.c.b16 %v954, %v952
    %v1037 = vpack.c.b16 %v957, %v955
    %v1038 = vpack.c.b16 %v958, %v956
    %v1039 = vpack.c.b16 %v961, %v959
    %v1040 = vpack.c.b16 %v962, %v960
    %v1041 = vpack.c.b16 %v965, %v963
    %v1042 = vpack.c.b16 %v966, %v964
    %v1043 = vpack.c.b16 %v969, %v967
    %v1044 = vpack.c.b16 %v970, %v968
    %v1045 = vpack.c.b16 %v973, %v971
    %v1046 = vpack.c.b16 %v974, %v972
    %v1047 = vpack.c.b16 %v977, %v975
    %v1048 = vpack.c.b16 %v978, %v976
    %v1049 = vpack.c.b16 %v981, %v979
    %v1050 = vpack.c.b16 %v982, %v980
    %v1051 = vpack.c.b16 %v985, %v983
    %v1052 = vpack.c.b16 %v986, %v984
    %v1053 = vpack.c.b16 %v989, %v987
    %v1054 = vpack.c.b16 %v990, %v988
    %v1055 = vpack.c.b16 %v993, %v991
    %v1056 = vpack.c.b16 %v994, %v992
    %v1057 = vpack.c.b16 %v997, %v995
    %v1058 = vpack.c.b16 %v998, %v996
    %v1059 = vpack.c.b16 %v1001, %v999
    %v1060 = vpack.c.b16 %v1002, %v1000
    %v1061 = vpack.c.b16 %v1005, %v1003
    %v1062 = vpack.c.b16 %v1006, %v1004
    %v1063 = vpack.c.b16 %v1009, %v1007
    %v1064 = vpack.c.b16 %v1010, %v1008
    %v1065 = vpack.c.b16 %v1013, %v1011
    %v1066 = vpack.c.b16 %v1014, %v1012
    %v1067 = vpack.c.b16 %v1017, %v1015
    %v1068 = vpack.c.b16 %v1018, %v1016
    %v1069 = vpack.c.b16 %v1021, %v1019
    %v1070 = vpack.c.b16 %v1022, %v1020
    %1119 = vmatprep.subr.bf16.mxu0 %v1024
    %1120 = vmatpush1.bf16.msra.mxu0 %v1023
    %1121 = vmatprep.subr.bf16.mxu0 %v1026
    %1122 = vmatpush1.bf16.msra.mxu0 %v1025
    %1123 = vmatprep.subr.bf16.mxu0 %v1028
    %1124 = vmatpush1.bf16.msra.mxu0 %v1027
    %1125 = vmatprep.subr.bf16.mxu0 %v1030
    %1126 = vmatpush1.bf16.msra.mxu0 %v1029
    %1127 = vmatprep.subr.bf16.mxu0 %v1032
    %1128 = vmatpush1.bf16.msra.mxu0 %v1031
    %1129 = vmatprep.subr.bf16.mxu0 %v1034
    %1130 = vmatpush1.bf16.msra.mxu0 %v1033
    %1131 = vmatprep.subr.bf16.mxu0 %v1036
    %1132 = vmatpush1.bf16.msra.mxu0 %v1035
    %1133 = vmatprep.subr.bf16.mxu0 %v1038
    %1134 = vmatpush1.bf16.msra.mxu0 %v1037
    %1135 = vmatprep.subr.bf16.mxu0 %v1040
    %1136 = vmatpush1.bf16.msra.mxu0 %v1039
    %1137 = vmatprep.subr.bf16.mxu0 %v1042
    %1138 = vmatpush1.bf16.msra.mxu0 %v1041
    %1139 = vmatprep.subr.bf16.mxu0 %v1044
    %1140 = vmatpush1.bf16.msra.mxu0 %v1043
    %1141 = vmatprep.subr.bf16.mxu0 %v1046
    %1142 = vmatpush1.bf16.msra.mxu0 %v1045
    %1143 = vmatprep.subr.bf16.mxu0 %v1048
    %1144 = vmatpush1.bf16.msra.mxu0 %v1047
    %1145 = vmatprep.subr.bf16.mxu0 %v1050
    %1146 = vmatpush1.bf16.msra.mxu0 %v1049
    %1147 = vmatprep.subr.bf16.mxu0 %v1052
    %1148 = vmatpush1.bf16.msra.mxu0 %v1051
    %1149 = vmatprep.subr.bf16.mxu0 %v1054
    %1150 = vmatpush1.bf16.msra.mxu0 %v1053
    %1151 = vmatprep.mubr.bf16.mxu0 %v817
    %1152 = vmatmul.mubr.bf16.gmra.mrb[0].mxu0 %v816
    %v1153 = vpop.f32.mrb[0].mxu0
    %v1154 = vadd.f32 %v872, %v1153
    %v1155 = vpop.f32.mrb[0].mxu0
    %v1156 = vadd.f32 %v876, %v1155
    %v1157 = vpop.f32.mrb[0].mxu0
    %v1158 = vadd.f32 %v872, %v1157
    %v1159 = vpop.f32.mrb[0].mxu0
    %v1160 = vadd.f32 %v876, %v1159
    %1161 = vdwg.mxu0
    %1162 = vmatprep.subr.bf16.mxu0 %v1056
    %1163 = vmatpush1.bf16.msra.mxu0 %v1055
    %1164 = vmatprep.subr.bf16.mxu0 %v1058
    %1165 = vmatpush1.bf16.msra.mxu0 %v1057
    %1166 = vmatprep.subr.bf16.mxu0 %v1060
    %1167 = vmatpush1.bf16.msra.mxu0 %v1059
    %1168 = vmatprep.subr.bf16.mxu0 %v1062
    %1169 = vmatpush1.bf16.msra.mxu0 %v1061
    %1170 = vmatprep.subr.bf16.mxu0 %v1064
    %1171 = vmatpush1.bf16.msra.mxu0 %v1063
    %1172 = vmatprep.subr.bf16.mxu0 %v1066
    %1173 = vmatpush1.bf16.msra.mxu0 %v1065
    %1174 = vmatprep.subr.bf16.mxu0 %v1068
    %1175 = vmatpush1.bf16.msra.mxu0 %v1067
    %1176 = vmatprep.subr.bf16.mxu0 %v1070
    %1177 = vmatpush1.bf16.msra.mxu0 %v1069
    %1178 = vmatprep.subr.bf16.mxu0 0
    %1179 = vmatpush1.bf16.msra.mxu0 0
    %1180 = vmatprep.subr.bf16.mxu0 0
    %1181 = vmatpush1.bf16.msra.mxu0 0
    %1182 = vmatprep.subr.bf16.mxu0 0
    %1183 = vmatpush1.bf16.msra.mxu0 0
    %1184 = vmatprep.subr.bf16.mxu0 0
    %1185 = vmatpush1.bf16.msra.mxu0 0
    %1186 = vmatprep.subr.bf16.mxu0 0
    %1187 = vmatpush1.bf16.msra.mxu0 0
    %1188 = vmatprep.subr.bf16.mxu0 0
    %1189 = vmatpush1.bf16.msra.mxu0 0
    %1190 = vmatprep.subr.bf16.mxu0 0
    %1191 = vmatpush1.bf16.msra.mxu0 0
    %1192 = vmatprep.subr.bf16.mxu0 0
    %1193 = vmatpush1.bf16.msra.mxu0 0
    %1194 = vmatprep.mubr.bf16.mxu0 0
    %1195 = vmatmul.mubr.bf16.gmra.mrb[0].mxu0 %v818
    %v1196 = vpop.f32.mrb[0].mxu0
    %v1197 = vadd.f32 %v1154, %v1196
    %v1198 = vpop.f32.mrb[0].mxu0
    %v1199 = vadd.f32 %v1156, %v1198
    %v1200 = vpop.f32.mrb[0].mxu0
    %v1201 = vadd.f32 %v1158, %v1200
    %v1202 = vpop.f32.mrb[0].mxu0
    %v1203 = vadd.f32 %v1160, %v1202
    %1204 = vdwg.mxu0
    %v1205 = vmax.f32 %v1197, 0.0
    %v1206 = vmax.f32 %v1199, 0.0
    %v1207 = vmax.f32 %v1201, 0.0
    %v1208 = vmax.f32 %v1203, 0.0
    %v1209 = vrot.slane %v1205, 6
    %v1210 = vrot.slane %v1206, 6
    %v1211 = vrot.slane %v1207, 6
    %v1212 = vrot.slane %v1208, 6
    %v1213 = vsel %vm156, %v1209, %v1211
    %v1214 = vsel %vm156, %v1210, %v1212
    %v1215 = vsel %vm156, %v1211, %v1209
    %v1216 = vsel %vm156, %v1212, %v1210
    %v1217 = vsel %vm161, %v1215, 0.0
    %v1218 = vsel %vm161, %v1216, 0.0
    %v1219 = vsel %vm162, %v1213, 0.0
    %v1220 = vsel %vm162, %v1214, 0.0
    %v1221 = vrot.slane %v1205, 2
    %v1222 = vrot.slane %v1206, 2
    %v1223 = vrot.slane %v1207, 2
    %v1224 = vrot.slane %v1208, 2
    %v1225 = vsel %vm167, %v1221, %v1223
    %v1226 = vsel %vm167, %v1222, %v1224
    %v1227 = vsel %vm167, %v1223, %v1221
    %v1228 = vsel %vm167, %v1224, %v1222
    %v1229 = vsel %vm172, %v1225, 0.0
    %v1230 = vsel %vm172, %v1226, 0.0
    %v1231 = vsel %vm173, %v1227, 0.0
    %v1232 = vsel %vm173, %v1228, 0.0
    %v1233 = vpack.c.bf16 %v1219, %v1217
    %v1234 = vpack.c.bf16 %v1220, %v1218
    %v1235 = vpack.c.bf16 %v1207, %v1205
    %v1236 = vpack.c.bf16 %v1208, %v1206
    %v1237 = vpack.c.bf16 %v1231, %v1229
    %v1238 = vpack.c.bf16 %v1232, %v1230
    %v1239 = vld [vmem:[#allocation11] sm:$0xff]
    %v1240 = vld [vmem:[#allocation11 + $0x8] sm:$0xff]
    %v1241 = vld [vmem:[#allocation11 + $0x10] sm:$0xff]
    %v1242 = vld [vmem:[#allocation11 + $0x18] sm:$0xff]
    %v1243 = vld [vmem:[#allocation11 + $0x20] sm:$0xff]
    %v1244 = vld [vmem:[#allocation11 + $0x28] sm:$0xff]
    %v1245 = vld [vmem:[#allocation11 + $0x30] sm:$0xff]
    %v1246 = vld [vmem:[#allocation11 + $0x38] sm:$0xff]
    %v1247 = vld [vmem:[#allocation11 + $0x40] sm:$0xff]
    %v1248 = vld [vmem:[#allocation11 + $0x48] sm:$0xff]
    %v1249 = vld [vmem:[#allocation11 + $0x50] sm:$0xff]
    %v1250 = vld [vmem:[#allocation11 + $0x58] sm:$0xff]
    %v1251 = vld [vmem:[#allocation11 + $0x60] sm:$0xff]
    %v1252 = vld [vmem:[#allocation11 + $0x68] sm:$0xff]
    %v1253 = vld [vmem:[#allocation11 + $0x70] sm:$0xff]
    %v1254 = vld [vmem:[#allocation11 + $0x78] sm:$0xff]
    %v1255 = vld [vmem:[#allocation11 + $0x80] sm:$0xff]
    %v1256 = vld [vmem:[#allocation11 + $0x88] sm:$0xff]
    %v1257 = vld [vmem:[#allocation11 + $0x90] sm:$0xff]
    %v1258 = vld [vmem:[#allocation11 + $0x98] sm:$0xff]
    %v1259 = vld [vmem:[#allocation11 + $0xa0] sm:$0xff]
    %v1260 = vld [vmem:[#allocation11 + $0xa8] sm:$0xff]
    %v1261 = vld [vmem:[#allocation11 + $0xb0] sm:$0xff]
    %v1262 = vld [vmem:[#allocation11 + $0xb8] sm:$0xff]
    %v1263 = vld [vmem:[#allocation11 + $0xc0] sm:$0xff]
    %v1264 = vld [vmem:[#allocation11 + $0xc8] sm:$0xff]
    %v1265 = vld [vmem:[#allocation11 + $0xd0] sm:$0xff]
    %v1266 = vld [vmem:[#allocation11 + $0xd8] sm:$0xff]
    %v1267 = vld [vmem:[#allocation11 + $0xe0] sm:$0xff]
    %v1268 = vld [vmem:[#allocation11 + $0xe8] sm:$0xff]
    %v1269 = vld [vmem:[#allocation11 + $0xf0] sm:$0xff]
    %v1270 = vld [vmem:[#allocation11 + $0xf8] sm:$0xff]
    %v1271 = vld [vmem:[#allocation11 + $0x100] sm:$0xff]
    %v1272 = vld [vmem:[#allocation11 + $0x108] sm:$0xff]
    %v1273 = vld [vmem:[#allocation11 + $0x110] sm:$0xff]
    %v1274 = vld [vmem:[#allocation11 + $0x118] sm:$0xff]
    %v1275 = vld [vmem:[#allocation11 + $0x120] sm:$0xff]
    %v1276 = vld [vmem:[#allocation11 + $0x128] sm:$0xff]
    %v1277 = vld [vmem:[#allocation11 + $0x130] sm:$0xff]
    %v1278 = vld [vmem:[#allocation11 + $0x138] sm:$0xff]
    %v1279 = vld [vmem:[#allocation11 + $0x140] sm:$0xff]
    %v1280 = vld [vmem:[#allocation11 + $0x148] sm:$0xff]
    %v1281 = vld [vmem:[#allocation11 + $0x150] sm:$0xff]
    %v1282 = vld [vmem:[#allocation11 + $0x158] sm:$0xff]
    %v1283 = vld [vmem:[#allocation11 + $0x160] sm:$0xff]
    %v1284 = vld [vmem:[#allocation11 + $0x168] sm:$0xff]
    %v1285 = vld [vmem:[#allocation11 + $0x170] sm:$0xff]
    %v1286 = vld [vmem:[#allocation11 + $0x178] sm:$0xff]
    %v1287 = vld [vmem:[#allocation11 + $0x180] sm:$0xff]
    %v1288 = vld [vmem:[#allocation11 + $0x188] sm:$0xff]
    %v1289 = vld [vmem:[#allocation11 + $0x190] sm:$0xff]
    %v1290 = vld [vmem:[#allocation11 + $0x198] sm:$0xff]
    %v1291 = vld [vmem:[#allocation11 + $0x1a0] sm:$0xff]
    %v1292 = vld [vmem:[#allocation11 + $0x1a8] sm:$0xff]
    %v1293 = vld [vmem:[#allocation11 + $0x1b0] sm:$0xff]
    %v1294 = vld [vmem:[#allocation11 + $0x1b8] sm:$0xff]
    %v1295 = vld [vmem:[#allocation11 + $0x1c0] sm:$0xff]
    %v1296 = vld [vmem:[#allocation11 + $0x1c8] sm:$0xff]
    %v1297 = vld [vmem:[#allocation11 + $0x1d0] sm:$0xff]
    %v1298 = vld [vmem:[#allocation11 + $0x1d8] sm:$0xff]
    %v1299 = vld [vmem:[#allocation11 + $0x1e0] sm:$0xff]
    %v1300 = vld [vmem:[#allocation11 + $0x1e8] sm:$0xff]
    %v1301 = vld [vmem:[#allocation11 + $0x1f0] sm:$0xff]
    %v1302 = vld [vmem:[#allocation11 + $0x1f8] sm:$0xff]
    %v1303 = vld [vmem:[#allocation11 + $0x200] sm:$0xff]
    %v1304 = vld [vmem:[#allocation11 + $0x208] sm:$0xff]
    %v1305 = vld [vmem:[#allocation11 + $0x210] sm:$0xff]
    %v1306 = vld [vmem:[#allocation11 + $0x218] sm:$0xff]
    %v1307 = vld [vmem:[#allocation11 + $0x220] sm:$0xff]
    %v1308 = vld [vmem:[#allocation11 + $0x228] sm:$0xff]
    %v1309 = vld [vmem:[#allocation11 + $0x230] sm:$0xff]
    %v1310 = vld [vmem:[#allocation11 + $0x238] sm:$0xff]
    %v1311 = vld [vmem:[#allocation11 + $0x240] sm:$0xff]
    %v1312 = vld [vmem:[#allocation11 + $0x248] sm:$0xff]
    %v1313 = vld [vmem:[#allocation11 + $0x250] sm:$0xff]
    %v1314 = vld [vmem:[#allocation11 + $0x258] sm:$0xff]
    %v1315 = vld [vmem:[#allocation11 + $0x260] sm:$0xff]
    %v1316 = vld [vmem:[#allocation11 + $0x268] sm:$0xff]
    %v1317 = vld [vmem:[#allocation11 + $0x270] sm:$0xff]
    %v1318 = vld [vmem:[#allocation11 + $0x278] sm:$0xff]
    %v1319 = vld [vmem:[#allocation11 + $0x280] sm:$0xff]
    %v1320 = vld [vmem:[#allocation11 + $0x288] sm:$0xff]
    %v1321 = vld [vmem:[#allocation11 + $0x290] sm:$0xff]
    %v1322 = vld [vmem:[#allocation11 + $0x298] sm:$0xff]
    %v1323 = vld [vmem:[#allocation11 + $0x2a0] sm:$0xff]
    %v1324 = vld [vmem:[#allocation11 + $0x2a8] sm:$0xff]
    %v1325 = vld [vmem:[#allocation11 + $0x2b0] sm:$0xff]
    %v1326 = vld [vmem:[#allocation11 + $0x2b8] sm:$0xff]
    %v1327 = vld [vmem:[#allocation11 + $0x2c0] sm:$0xff]
    %v1328 = vld [vmem:[#allocation11 + $0x2c8] sm:$0xff]
    %v1329 = vld [vmem:[#allocation11 + $0x2d0] sm:$0xff]
    %v1330 = vld [vmem:[#allocation11 + $0x2d8] sm:$0xff]
    %v1331 = vld [vmem:[#allocation11 + $0x2e0] sm:$0xff]
    %v1332 = vld [vmem:[#allocation11 + $0x2e8] sm:$0xff]
    %v1333 = vld [vmem:[#allocation11 + $0x2f0] sm:$0xff]
    %v1334 = vld [vmem:[#allocation11 + $0x2f8] sm:$0xff]
    %v1335 = vld [vmem:[%s10] sm:$0x3]
    %v1337 = vlaneseq
    %v1338 = vshrl.u32 %v1337, 7
    %v1339 = vsub.s32 0, %v1338
    %v1340 = vrot.slane %v1335, %v1339
    %v1341 = vlaneseq
    %v1342 = vshrl.u32 %v1341, 7
    %v1343 = vsub.s32 1, %v1342
    %v1344 = vrot.slane %v1335, %v1343
    %v1443 = vunpack.c.l.b16 %v1239
    %v1444 = vunpack.c.h.b16 %v1239
    %v1445 = vunpack.c.l.b16 %v1240
    %v1446 = vunpack.c.h.b16 %v1240
    %v1447 = vunpack.c.l.b16 %v1241
    %v1448 = vunpack.c.h.b16 %v1241
    %v1449 = vunpack.c.l.b16 %v1242
    %v1450 = vunpack.c.h.b16 %v1242
    %v1451 = vunpack.c.l.b16 %v1243
    %v1452 = vunpack.c.h.b16 %v1243
    %v1453 = vunpack.c.l.b16 %v1244
    %v1454 = vunpack.c.h.b16 %v1244
    %v1455 = vunpack.c.l.b16 %v1245
    %v1456 = vunpack.c.h.b16 %v1245
    %v1457 = vunpack.c.l.b16 %v1246
    %v1458 = vunpack.c.h.b16 %v1246
    %v1459 = vunpack.c.l.b16 %v1247
    %v1460 = vunpack.c.h.b16 %v1247
    %v1461 = vunpack.c.l.b16 %v1248
    %v1462 = vunpack.c.h.b16 %v1248
    %v1463 = vunpack.c.l.b16 %v1249
    %v1464 = vunpack.c.h.b16 %v1249
    %v1465 = vunpack.c.l.b16 %v1250
    %v1466 = vunpack.c.h.b16 %v1250
    %v1467 = vunpack.c.l.b16 %v1251
    %v1468 = vunpack.c.h.b16 %v1251
    %v1469 = vunpack.c.l.b16 %v1252
    %v1470 = vunpack.c.h.b16 %v1252
    %v1471 = vunpack.c.l.b16 %v1253
    %v1472 = vunpack.c.h.b16 %v1253
    %v1473 = vunpack.c.l.b16 %v1254
    %v1474 = vunpack.c.h.b16 %v1254
    %v1475 = vunpack.c.l.b16 %v1255
    %v1476 = vunpack.c.h.b16 %v1255
    %v1477 = vunpack.c.l.b16 %v1256
    %v1478 = vunpack.c.h.b16 %v1256
    %v1479 = vunpack.c.l.b16 %v1257
    %v1480 = vunpack.c.h.b16 %v1257
    %v1481 = vunpack.c.l.b16 %v1258
    %v1482 = vunpack.c.h.b16 %v1258
    %v1483 = vunpack.c.l.b16 %v1259
    %v1484 = vunpack.c.h.b16 %v1259
    %v1485 = vunpack.c.l.b16 %v1260
    %v1486 = vunpack.c.h.b16 %v1260
    %v1487 = vunpack.c.l.b16 %v1261
    %v1488 = vunpack.c.h.b16 %v1261
    %v1489 = vunpack.c.l.b16 %v1262
    %v1490 = vunpack.c.h.b16 %v1262
    %v1491 = vunpack.c.l.b16 %v1263
    %v1492 = vunpack.c.h.b16 %v1263
    %v1493 = vunpack.c.l.b16 %v1264
    %v1494 = vunpack.c.h.b16 %v1264
    %v1495 = vunpack.c.l.b16 %v1265
    %v1496 = vunpack.c.h.b16 %v1265
    %v1497 = vunpack.c.l.b16 %v1266
    %v1498 = vunpack.c.h.b16 %v1266
    %v1499 = vunpack.c.l.b16 %v1267
    %v1500 = vunpack.c.h.b16 %v1267
    %v1501 = vunpack.c.l.b16 %v1268
    %v1502 = vunpack.c.h.b16 %v1268
    %v1503 = vunpack.c.l.b16 %v1269
    %v1504 = vunpack.c.h.b16 %v1269
    %v1505 = vunpack.c.l.b16 %v1270
    %v1506 = vunpack.c.h.b16 %v1270
    %v1507 = vunpack.c.l.b16 %v1271
    %v1508 = vunpack.c.h.b16 %v1271
    %v1509 = vunpack.c.l.b16 %v1272
    %v1510 = vunpack.c.h.b16 %v1272
    %v1511 = vunpack.c.l.b16 %v1273
    %v1512 = vunpack.c.h.b16 %v1273
    %v1513 = vunpack.c.l.b16 %v1274
    %v1514 = vunpack.c.h.b16 %v1274
    %v1515 = vunpack.c.l.b16 %v1275
    %v1516 = vunpack.c.h.b16 %v1275
    %v1517 = vunpack.c.l.b16 %v1276
    %v1518 = vunpack.c.h.b16 %v1276
    %v1519 = vunpack.c.l.b16 %v1277
    %v1520 = vunpack.c.h.b16 %v1277
    %v1521 = vunpack.c.l.b16 %v1278
    %v1522 = vunpack.c.h.b16 %v1278
    %v1523 = vunpack.c.l.b16 %v1279
    %v1524 = vunpack.c.h.b16 %v1279
    %v1525 = vunpack.c.l.b16 %v1280
    %v1526 = vunpack.c.h.b16 %v1280
    %v1527 = vunpack.c.l.b16 %v1281
    %v1528 = vunpack.c.h.b16 %v1281
    %v1529 = vunpack.c.l.b16 %v1282
    %v1530 = vunpack.c.h.b16 %v1282
    %v1531 = vunpack.c.l.b16 %v1283
    %v1532 = vunpack.c.h.b16 %v1283
    %v1533 = vunpack.c.l.b16 %v1284
    %v1534 = vunpack.c.h.b16 %v1284
    %v1535 = vunpack.c.l.b16 %v1285
    %v1536 = vunpack.c.h.b16 %v1285
    %v1537 = vunpack.c.l.b16 %v1286
    %v1538 = vunpack.c.h.b16 %v1286
    %v1539 = vunpack.c.l.b16 %v1287
    %v1540 = vunpack.c.h.b16 %v1287
    %v1541 = vunpack.c.l.b16 %v1288
    %v1542 = vunpack.c.h.b16 %v1288
    %v1543 = vunpack.c.l.b16 %v1289
    %v1544 = vunpack.c.h.b16 %v1289
    %v1545 = vunpack.c.l.b16 %v1290
    %v1546 = vunpack.c.h.b16 %v1290
    %v1547 = vunpack.c.l.b16 %v1291
    %v1548 = vunpack.c.h.b16 %v1291
    %v1549 = vunpack.c.l.b16 %v1292
    %v1550 = vunpack.c.h.b16 %v1292
    %v1551 = vunpack.c.l.b16 %v1293
    %v1552 = vunpack.c.h.b16 %v1293
    %v1553 = vunpack.c.l.b16 %v1294
    %v1554 = vunpack.c.h.b16 %v1294
    %v1555 = vunpack.c.l.b16 %v1295
    %v1556 = vunpack.c.h.b16 %v1295
    %v1557 = vunpack.c.l.b16 %v1296
    %v1558 = vunpack.c.h.b16 %v1296
    %v1559 = vunpack.c.l.b16 %v1297
    %v1560 = vunpack.c.h.b16 %v1297
    %v1561 = vunpack.c.l.b16 %v1298
    %v1562 = vunpack.c.h.b16 %v1298
    %v1563 = vunpack.c.l.b16 %v1299
    %v1564 = vunpack.c.h.b16 %v1299
    %v1565 = vunpack.c.l.b16 %v1300
    %v1566 = vunpack.c.h.b16 %v1300
    %v1567 = vunpack.c.l.b16 %v1301
    %v1568 = vunpack.c.h.b16 %v1301
    %v1569 = vunpack.c.l.b16 %v1302
    %v1570 = vunpack.c.h.b16 %v1302
    %v1571 = vunpack.c.l.b16 %v1303
    %v1572 = vunpack.c.h.b16 %v1303
    %v1573 = vunpack.c.l.b16 %v1304
    %v1574 = vunpack.c.h.b16 %v1304
    %v1575 = vunpack.c.l.b16 %v1305
    %v1576 = vunpack.c.h.b16 %v1305
    %v1577 = vunpack.c.l.b16 %v1306
    %v1578 = vunpack.c.h.b16 %v1306
    %v1579 = vunpack.c.l.b16 %v1307
    %v1580 = vunpack.c.h.b16 %v1307
    %v1581 = vunpack.c.l.b16 %v1308
    %v1582 = vunpack.c.h.b16 %v1308
    %v1583 = vunpack.c.l.b16 %v1309
    %v1584 = vunpack.c.h.b16 %v1309
    %v1585 = vunpack.c.l.b16 %v1310
    %v1586 = vunpack.c.h.b16 %v1310
    %v1587 = vunpack.c.l.b16 %v1311
    %v1588 = vunpack.c.h.b16 %v1311
    %v1589 = vunpack.c.l.b16 %v1312
    %v1590 = vunpack.c.h.b16 %v1312
    %v1591 = vunpack.c.l.b16 %v1313
    %v1592 = vunpack.c.h.b16 %v1313
    %v1593 = vunpack.c.l.b16 %v1314
    %v1594 = vunpack.c.h.b16 %v1314
    %v1595 = vunpack.c.l.b16 %v1315
    %v1596 = vunpack.c.h.b16 %v1315
    %v1597 = vunpack.c.l.b16 %v1316
    %v1598 = vunpack.c.h.b16 %v1316
    %v1599 = vunpack.c.l.b16 %v1317
    %v1600 = vunpack.c.h.b16 %v1317
    %v1601 = vunpack.c.l.b16 %v1318
    %v1602 = vunpack.c.h.b16 %v1318
    %v1603 = vunpack.c.l.b16 %v1319
    %v1604 = vunpack.c.h.b16 %v1319
    %v1605 = vunpack.c.l.b16 %v1320
    %v1606 = vunpack.c.h.b16 %v1320
    %v1607 = vunpack.c.l.b16 %v1321
    %v1608 = vunpack.c.h.b16 %v1321
    %v1609 = vunpack.c.l.b16 %v1322
    %v1610 = vunpack.c.h.b16 %v1322
    %v1611 = vunpack.c.l.b16 %v1323
    %v1612 = vunpack.c.h.b16 %v1323
    %v1613 = vunpack.c.l.b16 %v1324
    %v1614 = vunpack.c.h.b16 %v1324
    %v1615 = vunpack.c.l.b16 %v1325
    %v1616 = vunpack.c.h.b16 %v1325
    %v1617 = vunpack.c.l.b16 %v1326
    %v1618 = vunpack.c.h.b16 %v1326
    %v1619 = vunpack.c.l.b16 %v1327
    %v1620 = vunpack.c.h.b16 %v1327
    %v1621 = vunpack.c.l.b16 %v1328
    %v1622 = vunpack.c.h.b16 %v1328
    %v1623 = vunpack.c.l.b16 %v1329
    %v1624 = vunpack.c.h.b16 %v1329
    %v1625 = vunpack.c.l.b16 %v1330
    %v1626 = vunpack.c.h.b16 %v1330
    %v1627 = vunpack.c.l.b16 %v1331
    %v1628 = vunpack.c.h.b16 %v1331
    %v1629 = vunpack.c.l.b16 %v1332
    %v1630 = vunpack.c.h.b16 %v1332
    %v1631 = vunpack.c.l.b16 %v1333
    %v1632 = vunpack.c.h.b16 %v1333
    %v1633 = vunpack.c.l.b16 %v1334
    %v1634 = vunpack.c.h.b16 %v1334
    %v1635 = vpack.c.b16 %v1445, %v1443
    %v1636 = vpack.c.b16 %v1446, %v1444
    %v1637 = vpack.c.b16 %v1449, %v1447
    %v1638 = vpack.c.b16 %v1450, %v1448
    %v1639 = vpack.c.b16 %v1453, %v1451
    %v1640 = vpack.c.b16 %v1454, %v1452
    %v1641 = vpack.c.b16 %v1457, %v1455
    %v1642 = vpack.c.b16 %v1458, %v1456
    %v1643 = vpack.c.b16 %v1461, %v1459
    %v1644 = vpack.c.b16 %v1462, %v1460
    %v1645 = vpack.c.b16 %v1465, %v1463
    %v1646 = vpack.c.b16 %v1466, %v1464
    %v1647 = vpack.c.b16 %v1469, %v1467
    %v1648 = vpack.c.b16 %v1470, %v1468
    %v1649 = vpack.c.b16 %v1473, %v1471
    %v1650 = vpack.c.b16 %v1474, %v1472
    %v1651 = vpack.c.b16 %v1477, %v1475
    %v1652 = vpack.c.b16 %v1478, %v1476
    %v1653 = vpack.c.b16 %v1481, %v1479
    %v1654 = vpack.c.b16 %v1482, %v1480
    %v1655 = vpack.c.b16 %v1485, %v1483
    %v1656 = vpack.c.b16 %v1486, %v1484
    %v1657 = vpack.c.b16 %v1489, %v1487
    %v1658 = vpack.c.b16 %v1490, %v1488
    %v1659 = vpack.c.b16 %v1493, %v1491
    %v1660 = vpack.c.b16 %v1494, %v1492
    %v1661 = vpack.c.b16 %v1497, %v1495
    %v1662 = vpack.c.b16 %v1498, %v1496
    %v1663 = vpack.c.b16 %v1501, %v1499
    %v1664 = vpack.c.b16 %v1502, %v1500
    %v1665 = vpack.c.b16 %v1505, %v1503
    %v1666 = vpack.c.b16 %v1506, %v1504
    %v1667 = vpack.c.b16 %v1509, %v1507
    %v1668 = vpack.c.b16 %v1510, %v1508
    %v1669 = vpack.c.b16 %v1513, %v1511
    %v1670 = vpack.c.b16 %v1514, %v1512
    %v1671 = vpack.c.b16 %v1517, %v1515
    %v1672 = vpack.c.b16 %v1518, %v1516
    %v1673 = vpack.c.b16 %v1521, %v1519
    %v1674 = vpack.c.b16 %v1522, %v1520
    %v1675 = vpack.c.b16 %v1525, %v1523
    %v1676 = vpack.c.b16 %v1526, %v1524
    %v1677 = vpack.c.b16 %v1529, %v1527
    %v1678 = vpack.c.b16 %v1530, %v1528
    %v1679 = vpack.c.b16 %v1533, %v1531
    %v1680 = vpack.c.b16 %v1534, %v1532
    %v1681 = vpack.c.b16 %v1537, %v1535
    %v1682 = vpack.c.b16 %v1538, %v1536
    %v1683 = vpack.c.b16 %v1541, %v1539
    %v1684 = vpack.c.b16 %v1542, %v1540
    %v1685 = vpack.c.b16 %v1545, %v1543
    %v1686 = vpack.c.b16 %v1546, %v1544
    %v1687 = vpack.c.b16 %v1549, %v1547
    %v1688 = vpack.c.b16 %v1550, %v1548
    %v1689 = vpack.c.b16 %v1553, %v1551
    %v1690 = vpack.c.b16 %v1554, %v1552
    %v1691 = vpack.c.b16 %v1557, %v1555
    %v1692 = vpack.c.b16 %v1558, %v1556
    %v1693 = vpack.c.b16 %v1561, %v1559
    %v1694 = vpack.c.b16 %v1562, %v1560
    %v1695 = vpack.c.b16 %v1565, %v1563
    %v1696 = vpack.c.b16 %v1566, %v1564
    %v1697 = vpack.c.b16 %v1569, %v1567
    %v1698 = vpack.c.b16 %v1570, %v1568
    %v1699 = vpack.c.b16 %v1573, %v1571
    %v1700 = vpack.c.b16 %v1574, %v1572
    %v1701 = vpack.c.b16 %v1577, %v1575
    %v1702 = vpack.c.b16 %v1578, %v1576
    %v1703 = vpack.c.b16 %v1581, %v1579
    %v1704 = vpack.c.b16 %v1582, %v1580
    %v1705 = vpack.c.b16 %v1585, %v1583
    %v1706 = vpack.c.b16 %v1586, %v1584
    %v1707 = vpack.c.b16 %v1589, %v1587
    %v1708 = vpack.c.b16 %v1590, %v1588
    %v1709 = vpack.c.b16 %v1593, %v1591
    %v1710 = vpack.c.b16 %v1594, %v1592
    %v1711 = vpack.c.b16 %v1597, %v1595
    %v1712 = vpack.c.b16 %v1598, %v1596
    %v1713 = vpack.c.b16 %v1601, %v1599
    %v1714 = vpack.c.b16 %v1602, %v1600
    %v1715 = vpack.c.b16 %v1605, %v1603
    %v1716 = vpack.c.b16 %v1606, %v1604
    %v1717 = vpack.c.b16 %v1609, %v1607
    %v1718 = vpack.c.b16 %v1610, %v1608
    %v1719 = vpack.c.b16 %v1613, %v1611
    %v1720 = vpack.c.b16 %v1614, %v1612
    %v1721 = vpack.c.b16 %v1617, %v1615
    %v1722 = vpack.c.b16 %v1618, %v1616
    %v1723 = vpack.c.b16 %v1621, %v1619
    %v1724 = vpack.c.b16 %v1622, %v1620
    %v1725 = vpack.c.b16 %v1625, %v1623
    %v1726 = vpack.c.b16 %v1626, %v1624
    %v1727 = vpack.c.b16 %v1629, %v1627
    %v1728 = vpack.c.b16 %v1630, %v1628
    %v1729 = vpack.c.b16 %v1633, %v1631
    %v1730 = vpack.c.b16 %v1634, %v1632
    %1827 = vmatprep.subr.bf16.mxu0 %v1636
    %1828 = vmatpush1.bf16.msra.mxu0 %v1635
    %1829 = vmatprep.subr.bf16.mxu0 %v1638
    %1830 = vmatpush1.bf16.msra.mxu0 %v1637
    %1831 = vmatprep.subr.bf16.mxu0 %v1640
    %1832 = vmatpush1.bf16.msra.mxu0 %v1639
    %1833 = vmatprep.subr.bf16.mxu0 %v1642
    %1834 = vmatpush1.bf16.msra.mxu0 %v1641
    %1835 = vmatprep.subr.bf16.mxu0 %v1644
    %1836 = vmatpush1.bf16.msra.mxu0 %v1643
    %1837 = vmatprep.subr.bf16.mxu0 %v1646
    %1838 = vmatpush1.bf16.msra.mxu0 %v1645
    %1839 = vmatprep.subr.bf16.mxu0 %v1648
    %1840 = vmatpush1.bf16.msra.mxu0 %v1647
    %1841 = vmatprep.subr.bf16.mxu0 %v1650
    %1842 = vmatpush1.bf16.msra.mxu0 %v1649
    %1843 = vmatprep.subr.bf16.mxu0 %v1652
    %1844 = vmatpush1.bf16.msra.mxu0 %v1651
    %1845 = vmatprep.subr.bf16.mxu0 %v1654
    %1846 = vmatpush1.bf16.msra.mxu0 %v1653
    %1847 = vmatprep.subr.bf16.mxu0 %v1656
    %1848 = vmatpush1.bf16.msra.mxu0 %v1655
    %1849 = vmatprep.subr.bf16.mxu0 %v1658
    %1850 = vmatpush1.bf16.msra.mxu0 %v1657
    %1851 = vmatprep.subr.bf16.mxu0 %v1660
    %1852 = vmatpush1.bf16.msra.mxu0 %v1659
    %1853 = vmatprep.subr.bf16.mxu0 %v1662
    %1854 = vmatpush1.bf16.msra.mxu0 %v1661
    %1855 = vmatprep.subr.bf16.mxu0 %v1664
    %1856 = vmatpush1.bf16.msra.mxu0 %v1663
    %1857 = vmatprep.subr.bf16.mxu0 %v1666
    %1858 = vmatpush1.bf16.msra.mxu0 %v1665
    %1859 = vmatprep.mubr.bf16.mxu0 %v1234
    %1860 = vmatmul.mubr.bf16.gmra.mrb[0].mxu0 %v1233
    %v1861 = vpop.f32.mrb[0].mxu0
    %v1862 = vadd.f32 %v1340, %v1861
    %v1863 = vpop.f32.mrb[0].mxu0
    %v1864 = vadd.f32 %v1344, %v1863
    %v1865 = vpop.f32.mrb[0].mxu0
    %v1866 = vadd.f32 %v1340, %v1865
    %v1867 = vpop.f32.mrb[0].mxu0
    %v1868 = vadd.f32 %v1344, %v1867
    %1869 = vdwg.mxu0
    %1870 = vmatprep.subr.bf16.mxu0 %v1668
    %1871 = vmatpush1.bf16.msra.mxu0 %v1667
    %1872 = vmatprep.subr.bf16.mxu0 %v1670
    %1873 = vmatpush1.bf16.msra.mxu0 %v1669
    %1874 = vmatprep.subr.bf16.mxu0 %v1672
    %1875 = vmatpush1.bf16.msra.mxu0 %v1671
    %1876 = vmatprep.subr.bf16.mxu0 %v1674
    %1877 = vmatpush1.bf16.msra.mxu0 %v1673
    %1878 = vmatprep.subr.bf16.mxu0 %v1676
    %1879 = vmatpush1.bf16.msra.mxu0 %v1675
    %1880 = vmatprep.subr.bf16.mxu0 %v1678
    %1881 = vmatpush1.bf16.msra.mxu0 %v1677
    %1882 = vmatprep.subr.bf16.mxu0 %v1680
    %1883 = vmatpush1.bf16.msra.mxu0 %v1679
    %1884 = vmatprep.subr.bf16.mxu0 %v1682
    %1885 = vmatpush1.bf16.msra.mxu0 %v1681
    %1886 = vmatprep.subr.bf16.mxu0 %v1684
    %1887 = vmatpush1.bf16.msra.mxu0 %v1683
    %1888 = vmatprep.subr.bf16.mxu0 %v1686
    %1889 = vmatpush1.bf16.msra.mxu0 %v1685
    %1890 = vmatprep.subr.bf16.mxu0 %v1688
    %1891 = vmatpush1.bf16.msra.mxu0 %v1687
    %1892 = vmatprep.subr.bf16.mxu0 %v1690
    %1893 = vmatpush1.bf16.msra.mxu0 %v1689
    %1894 = vmatprep.subr.bf16.mxu0 %v1692
    %1895 = vmatpush1.bf16.msra.mxu0 %v1691
    %1896 = vmatprep.subr.bf16.mxu0 %v1694
    %1897 = vmatpush1.bf16.msra.mxu0 %v1693
    %1898 = vmatprep.subr.bf16.mxu0 %v1696
    %1899 = vmatpush1.bf16.msra.mxu0 %v1695
    %1900 = vmatprep.subr.bf16.mxu0 %v1698
    %1901 = vmatpush1.bf16.msra.mxu0 %v1697
    %1902 = vmatprep.mubr.bf16.mxu0 %v1236
    %1903 = vmatmul.mubr.bf16.gmra.mrb[0].mxu0 %v1235
    %v1904 = vpop.f32.mrb[0].mxu0
    %v1905 = vadd.f32 %v1862, %v1904
    %v1906 = vpop.f32.mrb[0].mxu0
    %v1907 = vadd.f32 %v1864, %v1906
    %v1908 = vpop.f32.mrb[0].mxu0
    %v1909 = vadd.f32 %v1866, %v1908
    %v1910 = vpop.f32.mrb[0].mxu0
    %v1911 = vadd.f32 %v1868, %v1910
    %1912 = vdwg.mxu0
    %1913 = vmatprep.subr.bf16.mxu0 %v1700
    %1914 = vmatpush1.bf16.msra.mxu0 %v1699
    %1915 = vmatprep.subr.bf16.mxu0 %v1702
    %1916 = vmatpush1.bf16.msra.mxu0 %v1701
    %1917 = vmatprep.subr.bf16.mxu0 %v1704
    %1918 = vmatpush1.bf16.msra.mxu0 %v1703
    %1919 = vmatprep.subr.bf16.mxu0 %v1706
    %1920 = vmatpush1.bf16.msra.mxu0 %v1705
    %1921 = vmatprep.subr.bf16.mxu0 %v1708
    %1922 = vmatpush1.bf16.msra.mxu0 %v1707
    %1923 = vmatprep.subr.bf16.mxu0 %v1710
    %1924 = vmatpush1.bf16.msra.mxu0 %v1709
    %1925 = vmatprep.subr.bf16.mxu0 %v1712
    %1926 = vmatpush1.bf16.msra.mxu0 %v1711
    %1927 = vmatprep.subr.bf16.mxu0 %v1714
    %1928 = vmatpush1.bf16.msra.mxu0 %v1713
    %1929 = vmatprep.subr.bf16.mxu0 %v1716
    %1930 = vmatpush1.bf16.msra.mxu0 %v1715
    %1931 = vmatprep.subr.bf16.mxu0 %v1718
    %1932 = vmatpush1.bf16.msra.mxu0 %v1717
    %1933 = vmatprep.subr.bf16.mxu0 %v1720
    %1934 = vmatpush1.bf16.msra.mxu0 %v1719
    %1935 = vmatprep.subr.bf16.mxu0 %v1722
    %1936 = vmatpush1.bf16.msra.mxu0 %v1721
    %1937 = vmatprep.subr.bf16.mxu0 %v1724
    %1938 = vmatpush1.bf16.msra.mxu0 %v1723
    %1939 = vmatprep.subr.bf16.mxu0 %v1726
    %1940 = vmatpush1.bf16.msra.mxu0 %v1725
    %1941 = vmatprep.subr.bf16.mxu0 %v1728
    %1942 = vmatpush1.bf16.msra.mxu0 %v1727
    %1943 = vmatprep.subr.bf16.mxu0 %v1730
    %1944 = vmatpush1.bf16.msra.mxu0 %v1729
    %1945 = vmatprep.mubr.bf16.mxu0 %v1238
    %1946 = vmatmul.mubr.bf16.gmra.mrb[0].mxu0 %v1237
    %v1947 = vpop.f32.mrb[0].mxu0
    %v1948 = vadd.f32 %v1905, %v1947
    %v1949 = vpop.f32.mrb[0].mxu0
    %v1950 = vadd.f32 %v1907, %v1949
    %v1951 = vpop.f32.mrb[0].mxu0
    %v1952 = vadd.f32 %v1909, %v1951
    %v1953 = vpop.f32.mrb[0].mxu0
    %v1954 = vadd.f32 %v1911, %v1953
    %1955 = vdwg.mxu0
    %v1956 = vmax.f32 %v1948, 0.0
    %v1957 = vmax.f32 %v1950, 0.0
    %v1958 = vmax.f32 %v1952, 0.0
    %v1959 = vmax.f32 %v1954, 0.0
    %v1960 = vadd.f32 %v1956, %v1958
    %v1961 = vrot.slane %v1960, 4
    %v1962 = vadd.f32 %v1960, %v1961
    %v1963 = vrot.slane %v1962, 2
    %v1964 = vadd.f32 %v1962, %v1963
    %v1965 = vrot.slane %v1964, 1
    %v1966 = vadd.f32 %v1964, %v1965
    %v1967 = vadd.f32 %v1957, %v1959
    %v1968 = vrot.slane %v1967, 4
    %v1969 = vadd.f32 %v1967, %v1968
    %v1970 = vrot.slane %v1969, 2
    %v1971 = vadd.f32 %v1969, %v1970
    %v1972 = vrot.slane %v1971, 1
    %v1973 = vadd.f32 %v1971, %v1972
    %v1974 = vmul.f32 %v1956, %v1956
    %v1975 = vmul.f32 %v1957, %v1957
    %v1976 = vmul.f32 %v1958, %v1958
    %v1977 = vmul.f32 %v1959, %v1959
    %v1978 = vadd.f32 %v1974, %v1976
    %v1979 = vrot.slane %v1978, 4
    %v1980 = vadd.f32 %v1978, %v1979
    %v1981 = vrot.slane %v1980, 2
    %v1982 = vadd.f32 %v1980, %v1981
    %v1983 = vrot.slane %v1982, 1
    %v1984 = vadd.f32 %v1982, %v1983
    %v1985 = vadd.f32 %v1975, %v1977
    %v1986 = vrot.slane %v1985, 4
    %v1987 = vadd.f32 %v1985, %v1986
    %v1988 = vrot.slane %v1987, 2
    %v1989 = vadd.f32 %v1987, %v1988
    %v1990 = vrot.slane %v1989, 1
    %v1991 = vadd.f32 %v1989, %v1990
    %v1992 = vmul.f32 %v1966, 0.0625
    %v1993 = vmul.f32 %v1973, 0.0625
    %v1994 = vmul.f32 %v1984, 0.0625
    %v1995 = vmul.f32 %v1991, 0.0625
    %v1996 = vmul.f32 %v1992, %v1992
    %v1997 = vmul.f32 %v1993, %v1993
    %v1998 = vsub.f32 %v1994, %v1996
    %v1999 = vsub.f32 %v1995, %v1997
    %v2000 = vadd.f32 %v1998, 1e-05
    %v2001 = vadd.f32 %v1999, 1e-05
    %v2002 = vrsqrt.pop %v2000
    %v2003 = vrsqrt.pop %v2001
    %v2004 = vsub.f32 %v1956, %v1992
    %v2005 = vsub.f32 %v1957, %v1993
    %v2006 = vsub.f32 %v1958, %v1992
    %v2007 = vsub.f32 %v1959, %v1993
    %v2008 = vmul.f32 %v2004, %v2002
    %v2009 = vmul.f32 %v2005, %v2003
    %v2010 = vmul.f32 %v2006, %v2002
    %v2011 = vmul.f32 %v2007, %v2003
    %v2012 = vld [vmem:[%s11] sm:$0x3]
    %v2014 = vlaneseq
    %v2015 = vshrl.u32 %v2014, 7
    %v2016 = vsub.s32 0, %v2015
    %v2017 = vrot.slane %v2012, %v2016
    %v2018 = vlaneseq
    %v2019 = vshrl.u32 %v2018, 7
    %v2020 = vsub.s32 1, %v2019
    %v2021 = vrot.slane %v2012, %v2020
    %v2024 = vmul.f32 %v2008, %v2017
    %v2025 = vmul.f32 %v2009, %v2021
    %v2026 = vmul.f32 %v2010, %v2017
    %v2027 = vmul.f32 %v2011, %v2021
    %v2028 = vld [vmem:[%s12] sm:$0x3]
    %v2030 = vlaneseq
    %v2031 = vshrl.u32 %v2030, 7
    %v2032 = vsub.s32 0, %v2031
    %v2033 = vrot.slane %v2028, %v2032
    %v2034 = vlaneseq
    %v2035 = vshrl.u32 %v2034, 7
    %v2036 = vsub.s32 1, %v2035
    %v2037 = vrot.slane %v2028, %v2036
    %v2040 = vadd.f32 %v2024, %v2033
    %v2041 = vadd.f32 %v2025, %v2037
    %v2042 = vadd.f32 %v2026, %v2033
    %v2043 = vadd.f32 %v2027, %v2037
    %v2044 = vpack.c.bf16 %v2042, %v2040
    %v2045 = vpack.c.bf16 %v2043, %v2041
    %v2046 = vld [vmem:[#allocation13] sm:$0xff]
    %v2047 = vld [vmem:[#allocation13 + $0x8] sm:$0xff]
    %v2048 = vld [vmem:[#allocation13 + $0x10] sm:$0xff]
    %v2049 = vld [vmem:[#allocation13 + $0x18] sm:$0xff]
    %v2050 = vld [vmem:[#allocation13 + $0x20] sm:$0xff]
    %v2051 = vld [vmem:[#allocation13 + $0x28] sm:$0xff]
    %v2052 = vld [vmem:[#allocation13 + $0x30] sm:$0xff]
    %v2053 = vld [vmem:[#allocation13 + $0x38] sm:$0xff]
    %v2054 = vld [vmem:[#allocation13 + $0x40] sm:$0xff]
    %v2055 = vld [vmem:[#allocation13 + $0x48] sm:$0xff]
    %v2056 = vld [vmem:[#allocation13 + $0x50] sm:$0xff]
    %v2057 = vld [vmem:[#allocation13 + $0x58] sm:$0xff]
    %v2058 = vld [vmem:[#allocation13 + $0x60] sm:$0xff]
    %v2059 = vld [vmem:[#allocation13 + $0x68] sm:$0xff]
    %v2060 = vld [vmem:[#allocation13 + $0x70] sm:$0xff]
    %v2061 = vld [vmem:[#allocation13 + $0x78] sm:$0xff]
    %v2062 = vld [vmem:[#allocation13 + $0x80] sm:$0xff]
    %v2063 = vld [vmem:[#allocation13 + $0x88] sm:$0xff]
    %v2064 = vld [vmem:[#allocation13 + $0x90] sm:$0xff]
    %v2065 = vld [vmem:[#allocation13 + $0x98] sm:$0xff]
    %v2066 = vld [vmem:[#allocation13 + $0xa0] sm:$0xff]
    %v2067 = vld [vmem:[#allocation13 + $0xa8] sm:$0xff]
    %v2068 = vld [vmem:[#allocation13 + $0xb0] sm:$0xff]
    %v2069 = vld [vmem:[#allocation13 + $0xb8] sm:$0xff]
    %v2070 = vld [vmem:[#allocation13 + $0xc0] sm:$0xff]
    %v2071 = vld [vmem:[#allocation13 + $0xc8] sm:$0xff]
    %v2072 = vld [vmem:[#allocation13 + $0xd0] sm:$0xff]
    %v2073 = vld [vmem:[#allocation13 + $0xd8] sm:$0xff]
    %v2074 = vld [vmem:[#allocation13 + $0xe0] sm:$0xff]
    %v2075 = vld [vmem:[#allocation13 + $0xe8] sm:$0xff]
    %v2076 = vld [vmem:[#allocation13 + $0xf0] sm:$0xff]
    %v2077 = vld [vmem:[#allocation13 + $0xf8] sm:$0xff]
    %v2078 = vld [vmem:[#allocation13 + $0x100] sm:$0xff]
    %v2079 = vld [vmem:[#allocation13 + $0x108] sm:$0xff]
    %v2080 = vld [vmem:[#allocation13 + $0x110] sm:$0xff]
    %v2081 = vld [vmem:[#allocation13 + $0x118] sm:$0xff]
    %v2082 = vld [vmem:[#allocation13 + $0x120] sm:$0xff]
    %v2083 = vld [vmem:[#allocation13 + $0x128] sm:$0xff]
    %v2084 = vld [vmem:[#allocation13 + $0x130] sm:$0xff]
    %v2085 = vld [vmem:[#allocation13 + $0x138] sm:$0xff]
    %v2086 = vld [vmem:[#allocation13 + $0x140] sm:$0xff]
    %v2087 = vld [vmem:[#allocation13 + $0x148] sm:$0xff]
    %v2088 = vld [vmem:[#allocation13 + $0x150] sm:$0xff]
    %v2089 = vld [vmem:[#allocation13 + $0x158] sm:$0xff]
    %v2090 = vld [vmem:[#allocation13 + $0x160] sm:$0xff]
    %v2091 = vld [vmem:[#allocation13 + $0x168] sm:$0xff]
    %v2092 = vld [vmem:[#allocation13 + $0x170] sm:$0xff]
    %v2093 = vld [vmem:[#allocation13 + $0x178] sm:$0xff]
    %v2094 = vld [vmem:[#allocation13 + $0x180] sm:$0xff]
    %v2095 = vld [vmem:[#allocation13 + $0x188] sm:$0xff]
    %v2096 = vld [vmem:[#allocation13 + $0x190] sm:$0xff]
    %v2097 = vld [vmem:[#allocation13 + $0x198] sm:$0xff]
    %v2098 = vld [vmem:[#allocation13 + $0x1a0] sm:$0xff]
    %v2099 = vld [vmem:[#allocation13 + $0x1a8] sm:$0xff]
    %v2100 = vld [vmem:[#allocation13 + $0x1b0] sm:$0xff]
    %v2101 = vld [vmem:[#allocation13 + $0x1b8] sm:$0xff]
    %v2102 = vld [vmem:[#allocation13 + $0x1c0] sm:$0xff]
    %v2103 = vld [vmem:[#allocation13 + $0x1c8] sm:$0xff]
    %v2104 = vld [vmem:[#allocation13 + $0x1d0] sm:$0xff]
    %v2105 = vld [vmem:[#allocation13 + $0x1d8] sm:$0xff]
    %v2106 = vld [vmem:[#allocation13 + $0x1e0] sm:$0xff]
    %v2107 = vld [vmem:[#allocation13 + $0x1e8] sm:$0xff]
    %v2108 = vld [vmem:[#allocation13 + $0x1f0] sm:$0xff]
    %v2109 = vld [vmem:[#allocation13 + $0x1f8] sm:$0xff]
    %v2110 = vld [vmem:[#allocation13 + $0x200] sm:$0xff]
    %v2111 = vld [vmem:[#allocation13 + $0x208] sm:$0xff]
    %v2112 = vld [vmem:[#allocation13 + $0x210] sm:$0xff]
    %v2113 = vld [vmem:[#allocation13 + $0x218] sm:$0xff]
    %v2114 = vld [vmem:[#allocation13 + $0x220] sm:$0xff]
    %v2115 = vld [vmem:[#allocation13 + $0x228] sm:$0xff]
    %v2116 = vld [vmem:[#allocation13 + $0x230] sm:$0xff]
    %v2117 = vld [vmem:[#allocation13 + $0x238] sm:$0xff]
    %v2118 = vld [vmem:[#allocation13 + $0x240] sm:$0xff]
    %v2119 = vld [vmem:[#allocation13 + $0x248] sm:$0xff]
    %v2120 = vld [vmem:[#allocation13 + $0x250] sm:$0xff]
    %v2121 = vld [vmem:[#allocation13 + $0x258] sm:$0xff]
    %v2122 = vld [vmem:[#allocation13 + $0x260] sm:$0xff]
    %v2123 = vld [vmem:[#allocation13 + $0x268] sm:$0xff]
    %v2124 = vld [vmem:[#allocation13 + $0x270] sm:$0xff]
    %v2125 = vld [vmem:[#allocation13 + $0x278] sm:$0xff]
    %v2126 = vld [vmem:[#allocation13 + $0x280] sm:$0xff]
    %v2127 = vld [vmem:[#allocation13 + $0x288] sm:$0xff]
    %v2128 = vld [vmem:[#allocation13 + $0x290] sm:$0xff]
    %v2129 = vld [vmem:[#allocation13 + $0x298] sm:$0xff]
    %v2130 = vld [vmem:[#allocation13 + $0x2a0] sm:$0xff]
    %v2131 = vld [vmem:[#allocation13 + $0x2a8] sm:$0xff]
    %v2132 = vld [vmem:[#allocation13 + $0x2b0] sm:$0xff]
    %v2133 = vld [vmem:[#allocation13 + $0x2b8] sm:$0xff]
    %v2134 = vld [vmem:[#allocation13 + $0x2c0] sm:$0xff]
    %v2135 = vld [vmem:[#allocation13 + $0x2c8] sm:$0xff]
    %v2136 = vld [vmem:[#allocation13 + $0x2d0] sm:$0xff]
    %v2137 = vld [vmem:[#allocation13 + $0x2d8] sm:$0xff]
    %v2138 = vld [vmem:[#allocation13 + $0x2e0] sm:$0xff]
    %v2139 = vld [vmem:[#allocation13 + $0x2e8] sm:$0xff]
    %v2140 = vld [vmem:[#allocation13 + $0x2f0] sm:$0xff]
    %v2141 = vld [vmem:[#allocation13 + $0x2f8] sm:$0xff]
    %v2142 = vld [vmem:[%s14] sm:$0x3f]
    %v2144 = vlaneseq
    %v2145 = vshrl.u32 %v2144, 7
    %v2146 = vsub.s32 0, %v2145
    %v2147 = vrot.slane %v2142, %v2146
    %v2148 = vlaneseq
    %v2149 = vshrl.u32 %v2148, 7
    %v2150 = vsub.s32 1, %v2149
    %v2151 = vrot.slane %v2142, %v2150
    %v2152 = vlaneseq
    %v2153 = vshrl.u32 %v2152, 7
    %v2154 = vsub.s32 2, %v2153
    %v2155 = vrot.slane %v2142, %v2154
    %v2156 = vlaneseq
    %v2157 = vshrl.u32 %v2156, 7
    %v2158 = vsub.s32 3, %v2157
    %v2159 = vrot.slane %v2142, %v2158
    %v2160 = vlaneseq
    %v2161 = vshrl.u32 %v2160, 7
    %v2162 = vsub.s32 4, %v2161
    %v2163 = vrot.slane %v2142, %v2162
    %v2164 = vlaneseq
    %v2165 = vshrl.u32 %v2164, 7
    %v2166 = vsub.s32 5, %v2165
    %v2167 = vrot.slane %v2142, %v2166
    %v2270 = vunpack.c.l.b16 %v2046
    %v2271 = vunpack.c.h.b16 %v2046
    %v2272 = vunpack.c.l.b16 %v2047
    %v2273 = vunpack.c.h.b16 %v2047
    %v2274 = vunpack.c.l.b16 %v2048
    %v2275 = vunpack.c.h.b16 %v2048
    %v2276 = vunpack.c.l.b16 %v2049
    %v2277 = vunpack.c.h.b16 %v2049
    %v2278 = vunpack.c.l.b16 %v2050
    %v2279 = vunpack.c.h.b16 %v2050
    %v2280 = vunpack.c.l.b16 %v2051
    %v2281 = vunpack.c.h.b16 %v2051
    %v2282 = vunpack.c.l.b16 %v2052
    %v2283 = vunpack.c.h.b16 %v2052
    %v2284 = vunpack.c.l.b16 %v2053
    %v2285 = vunpack.c.h.b16 %v2053
    %v2286 = vunpack.c.l.b16 %v2054
    %v2287 = vunpack.c.h.b16 %v2054
    %v2288 = vunpack.c.l.b16 %v2055
    %v2289 = vunpack.c.h.b16 %v2055
    %v2290 = vunpack.c.l.b16 %v2056
    %v2291 = vunpack.c.h.b16 %v2056
    %v2292 = vunpack.c.l.b16 %v2057
    %v2293 = vunpack.c.h.b16 %v2057
    %v2294 = vunpack.c.l.b16 %v2058
    %v2295 = vunpack.c.h.b16 %v2058
    %v2296 = vunpack.c.l.b16 %v2059
    %v2297 = vunpack.c.h.b16 %v2059
    %v2298 = vunpack.c.l.b16 %v2060
    %v2299 = vunpack.c.h.b16 %v2060
    %v2300 = vunpack.c.l.b16 %v2061
    %v2301 = vunpack.c.h.b16 %v2061
    %v2302 = vunpack.c.l.b16 %v2062
    %v2303 = vunpack.c.h.b16 %v2062
    %v2304 = vunpack.c.l.b16 %v2063
    %v2305 = vunpack.c.h.b16 %v2063
    %v2306 = vunpack.c.l.b16 %v2064
    %v2307 = vunpack.c.h.b16 %v2064
    %v2308 = vunpack.c.l.b16 %v2065
    %v2309 = vunpack.c.h.b16 %v2065
    %v2310 = vunpack.c.l.b16 %v2066
    %v2311 = vunpack.c.h.b16 %v2066
    %v2312 = vunpack.c.l.b16 %v2067
    %v2313 = vunpack.c.h.b16 %v2067
    %v2314 = vunpack.c.l.b16 %v2068
    %v2315 = vunpack.c.h.b16 %v2068
    %v2316 = vunpack.c.l.b16 %v2069
    %v2317 = vunpack.c.h.b16 %v2069
    %v2318 = vunpack.c.l.b16 %v2070
    %v2319 = vunpack.c.h.b16 %v2070
    %v2320 = vunpack.c.l.b16 %v2071
    %v2321 = vunpack.c.h.b16 %v2071
    %v2322 = vunpack.c.l.b16 %v2072
    %v2323 = vunpack.c.h.b16 %v2072
    %v2324 = vunpack.c.l.b16 %v2073
    %v2325 = vunpack.c.h.b16 %v2073
    %v2326 = vunpack.c.l.b16 %v2074
    %v2327 = vunpack.c.h.b16 %v2074
    %v2328 = vunpack.c.l.b16 %v2075
    %v2329 = vunpack.c.h.b16 %v2075
    %v2330 = vunpack.c.l.b16 %v2076
    %v2331 = vunpack.c.h.b16 %v2076
    %v2332 = vunpack.c.l.b16 %v2077
    %v2333 = vunpack.c.h.b16 %v2077
    %v2334 = vunpack.c.l.b16 %v2078
    %v2335 = vunpack.c.h.b16 %v2078
    %v2336 = vunpack.c.l.b16 %v2079
    %v2337 = vunpack.c.h.b16 %v2079
    %v2338 = vunpack.c.l.b16 %v2080
    %v2339 = vunpack.c.h.b16 %v2080
    %v2340 = vunpack.c.l.b16 %v2081
    %v2341 = vunpack.c.h.b16 %v2081
    %v2342 = vunpack.c.l.b16 %v2082
    %v2343 = vunpack.c.h.b16 %v2082
    %v2344 = vunpack.c.l.b16 %v2083
    %v2345 = vunpack.c.h.b16 %v2083
    %v2346 = vunpack.c.l.b16 %v2084
    %v2347 = vunpack.c.h.b16 %v2084
    %v2348 = vunpack.c.l.b16 %v2085
    %v2349 = vunpack.c.h.b16 %v2085
    %v2350 = vunpack.c.l.b16 %v2086
    %v2351 = vunpack.c.h.b16 %v2086
    %v2352 = vunpack.c.l.b16 %v2087
    %v2353 = vunpack.c.h.b16 %v2087
    %v2354 = vunpack.c.l.b16 %v2088
    %v2355 = vunpack.c.h.b16 %v2088
    %v2356 = vunpack.c.l.b16 %v2089
    %v2357 = vunpack.c.h.b16 %v2089
    %v2358 = vunpack.c.l.b16 %v2090
    %v2359 = vunpack.c.h.b16 %v2090
    %v2360 = vunpack.c.l.b16 %v2091
    %v2361 = vunpack.c.h.b16 %v2091
    %v2362 = vunpack.c.l.b16 %v2092
    %v2363 = vunpack.c.h.b16 %v2092
    %v2364 = vunpack.c.l.b16 %v2093
    %v2365 = vunpack.c.h.b16 %v2093
    %v2366 = vunpack.c.l.b16 %v2094
    %v2367 = vunpack.c.h.b16 %v2094
    %v2368 = vunpack.c.l.b16 %v2095
    %v2369 = vunpack.c.h.b16 %v2095
    %v2370 = vunpack.c.l.b16 %v2096
    %v2371 = vunpack.c.h.b16 %v2096
    %v2372 = vunpack.c.l.b16 %v2097
    %v2373 = vunpack.c.h.b16 %v2097
    %v2374 = vunpack.c.l.b16 %v2098
    %v2375 = vunpack.c.h.b16 %v2098
    %v2376 = vunpack.c.l.b16 %v2099
    %v2377 = vunpack.c.h.b16 %v2099
    %v2378 = vunpack.c.l.b16 %v2100
    %v2379 = vunpack.c.h.b16 %v2100
    %v2380 = vunpack.c.l.b16 %v2101
    %v2381 = vunpack.c.h.b16 %v2101
    %v2382 = vunpack.c.l.b16 %v2102
    %v2383 = vunpack.c.h.b16 %v2102
    %v2384 = vunpack.c.l.b16 %v2103
    %v2385 = vunpack.c.h.b16 %v2103
    %v2386 = vunpack.c.l.b16 %v2104
    %v2387 = vunpack.c.h.b16 %v2104
    %v2388 = vunpack.c.l.b16 %v2105
    %v2389 = vunpack.c.h.b16 %v2105
    %v2390 = vunpack.c.l.b16 %v2106
    %v2391 = vunpack.c.h.b16 %v2106
    %v2392 = vunpack.c.l.b16 %v2107
    %v2393 = vunpack.c.h.b16 %v2107
    %v2394 = vunpack.c.l.b16 %v2108
    %v2395 = vunpack.c.h.b16 %v2108
    %v2396 = vunpack.c.l.b16 %v2109
    %v2397 = vunpack.c.h.b16 %v2109
    %v2398 = vunpack.c.l.b16 %v2110
    %v2399 = vunpack.c.h.b16 %v2110
    %v2400 = vunpack.c.l.b16 %v2111
    %v2401 = vunpack.c.h.b16 %v2111
    %v2402 = vunpack.c.l.b16 %v2112
    %v2403 = vunpack.c.h.b16 %v2112
    %v2404 = vunpack.c.l.b16 %v2113
    %v2405 = vunpack.c.h.b16 %v2113
    %v2406 = vunpack.c.l.b16 %v2114
    %v2407 = vunpack.c.h.b16 %v2114
    %v2408 = vunpack.c.l.b16 %v2115
    %v2409 = vunpack.c.h.b16 %v2115
    %v2410 = vunpack.c.l.b16 %v2116
    %v2411 = vunpack.c.h.b16 %v2116
    %v2412 = vunpack.c.l.b16 %v2117
    %v2413 = vunpack.c.h.b16 %v2117
    %v2414 = vunpack.c.l.b16 %v2118
    %v2415 = vunpack.c.h.b16 %v2118
    %v2416 = vunpack.c.l.b16 %v2119
    %v2417 = vunpack.c.h.b16 %v2119
    %v2418 = vunpack.c.l.b16 %v2120
    %v2419 = vunpack.c.h.b16 %v2120
    %v2420 = vunpack.c.l.b16 %v2121
    %v2421 = vunpack.c.h.b16 %v2121
    %v2422 = vunpack.c.l.b16 %v2122
    %v2423 = vunpack.c.h.b16 %v2122
    %v2424 = vunpack.c.l.b16 %v2123
    %v2425 = vunpack.c.h.b16 %v2123
    %v2426 = vunpack.c.l.b16 %v2124
    %v2427 = vunpack.c.h.b16 %v2124
    %v2428 = vunpack.c.l.b16 %v2125
    %v2429 = vunpack.c.h.b16 %v2125
    %v2430 = vunpack.c.l.b16 %v2126
    %v2431 = vunpack.c.h.b16 %v2126
    %v2432 = vunpack.c.l.b16 %v2127
    %v2433 = vunpack.c.h.b16 %v2127
    %v2434 = vunpack.c.l.b16 %v2128
    %v2435 = vunpack.c.h.b16 %v2128
    %v2436 = vunpack.c.l.b16 %v2129
    %v2437 = vunpack.c.h.b16 %v2129
    %v2438 = vunpack.c.l.b16 %v2130
    %v2439 = vunpack.c.h.b16 %v2130
    %v2440 = vunpack.c.l.b16 %v2131
    %v2441 = vunpack.c.h.b16 %v2131
    %v2442 = vunpack.c.l.b16 %v2132
    %v2443 = vunpack.c.h.b16 %v2132
    %v2444 = vunpack.c.l.b16 %v2133
    %v2445 = vunpack.c.h.b16 %v2133
    %v2446 = vunpack.c.l.b16 %v2134
    %v2447 = vunpack.c.h.b16 %v2134
    %v2448 = vunpack.c.l.b16 %v2135
    %v2449 = vunpack.c.h.b16 %v2135
    %v2450 = vunpack.c.l.b16 %v2136
    %v2451 = vunpack.c.h.b16 %v2136
    %v2452 = vunpack.c.l.b16 %v2137
    %v2453 = vunpack.c.h.b16 %v2137
    %v2454 = vunpack.c.l.b16 %v2138
    %v2455 = vunpack.c.h.b16 %v2138
    %v2456 = vunpack.c.l.b16 %v2139
    %v2457 = vunpack.c.h.b16 %v2139
    %v2458 = vunpack.c.l.b16 %v2140
    %v2459 = vunpack.c.h.b16 %v2140
    %v2460 = vunpack.c.l.b16 %v2141
    %v2461 = vunpack.c.h.b16 %v2141
    %v2462 = vpack.c.b16 %v2276, %v2270
    %v2463 = vpack.c.b16 %v2277, %v2271
    %v2464 = vpack.c.b16 %v2278, %v2272
    %v2465 = vpack.c.b16 %v2279, %v2273
    %v2466 = vpack.c.b16 %v2280, %v2274
    %v2467 = vpack.c.b16 %v2281, %v2275
    %v2468 = vpack.c.b16 %v2288, %v2282
    %v2469 = vpack.c.b16 %v2289, %v2283
    %v2470 = vpack.c.b16 %v2290, %v2284
    %v2471 = vpack.c.b16 %v2291, %v2285
    %v2472 = vpack.c.b16 %v2292, %v2286
    %v2473 = vpack.c.b16 %v2293, %v2287
    %v2474 = vpack.c.b16 %v2300, %v2294
    %v2475 = vpack.c.b16 %v2301, %v2295
    %v2476 = vpack.c.b16 %v2302, %v2296
    %v2477 = vpack.c.b16 %v2303, %v2297
    %v2478 = vpack.c.b16 %v2304, %v2298
    %v2479 = vpack.c.b16 %v2305, %v2299
    %v2480 = vpack.c.b16 %v2312, %v2306
    %v2481 = vpack.c.b16 %v2313, %v2307
    %v2482 = vpack.c.b16 %v2314, %v2308
    %v2483 = vpack.c.b16 %v2315, %v2309
    %v2484 = vpack.c.b16 %v2316, %v2310
    %v2485 = vpack.c.b16 %v2317, %v2311
    %v2486 = vpack.c.b16 %v2324, %v2318
    %v2487 = vpack.c.b16 %v2325, %v2319
    %v2488 = vpack.c.b16 %v2326, %v2320
    %v2489 = vpack.c.b16 %v2327, %v2321
    %v2490 = vpack.c.b16 %v2328, %v2322
    %v2491 = vpack.c.b16 %v2329, %v2323
    %v2492 = vpack.c.b16 %v2336, %v2330
    %v2493 = vpack.c.b16 %v2337, %v2331
    %v2494 = vpack.c.b16 %v2338, %v2332
    %v2495 = vpack.c.b16 %v2339, %v2333
    %v2496 = vpack.c.b16 %v2340, %v2334
    %v2497 = vpack.c.b16 %v2341, %v2335
    %v2498 = vpack.c.b16 %v2348, %v2342
    %v2499 = vpack.c.b16 %v2349, %v2343
    %v2500 = vpack.c.b16 %v2350, %v2344
    %v2501 = vpack.c.b16 %v2351, %v2345
    %v2502 = vpack.c.b16 %v2352, %v2346
    %v2503 = vpack.c.b16 %v2353, %v2347
    %v2504 = vpack.c.b16 %v2360, %v2354
    %v2505 = vpack.c.b16 %v2361, %v2355
    %v2506 = vpack.c.b16 %v2362, %v2356
    %v2507 = vpack.c.b16 %v2363, %v2357
    %v2508 = vpack.c.b16 %v2364, %v2358
    %v2509 = vpack.c.b16 %v2365, %v2359
    %v2510 = vpack.c.b16 %v2372, %v2366
    %v2511 = vpack.c.b16 %v2373, %v2367
    %v2512 = vpack.c.b16 %v2374, %v2368
    %v2513 = vpack.c.b16 %v2375, %v2369
    %v2514 = vpack.c.b16 %v2376, %v2370
    %v2515 = vpack.c.b16 %v2377, %v2371
    %v2516 = vpack.c.b16 %v2384, %v2378
    %v2517 = vpack.c.b16 %v2385, %v2379
    %v2518 = vpack.c.b16 %v2386, %v2380
    %v2519 = vpack.c.b16 %v2387, %v2381
    %v2520 = vpack.c.b16 %v2388, %v2382
    %v2521 = vpack.c.b16 %v2389, %v2383
    %v2522 = vpack.c.b16 %v2396, %v2390
    %v2523 = vpack.c.b16 %v2397, %v2391
    %v2524 = vpack.c.b16 %v2398, %v2392
    %v2525 = vpack.c.b16 %v2399, %v2393
    %v2526 = vpack.c.b16 %v2400, %v2394
    %v2527 = vpack.c.b16 %v2401, %v2395
    %v2528 = vpack.c.b16 %v2408, %v2402
    %v2529 = vpack.c.b16 %v2409, %v2403
    %v2530 = vpack.c.b16 %v2410, %v2404
    %v2531 = vpack.c.b16 %v2411, %v2405
    %v2532 = vpack.c.b16 %v2412, %v2406
    %v2533 = vpack.c.b16 %v2413, %v2407
    %v2534 = vpack.c.b16 %v2420, %v2414
    %v2535 = vpack.c.b16 %v2421, %v2415
    %v2536 = vpack.c.b16 %v2422, %v2416
    %v2537 = vpack.c.b16 %v2423, %v2417
    %v2538 = vpack.c.b16 %v2424, %v2418
    %v2539 = vpack.c.b16 %v2425, %v2419
    %v2540 = vpack.c.b16 %v2432, %v2426
    %v2541 = vpack.c.b16 %v2433, %v2427
    %v2542 = vpack.c.b16 %v2434, %v2428
    %v2543 = vpack.c.b16 %v2435, %v2429
    %v2544 = vpack.c.b16 %v2436, %v2430
    %v2545 = vpack.c.b16 %v2437, %v2431
    %v2546 = vpack.c.b16 %v2444, %v2438
    %v2547 = vpack.c.b16 %v2445, %v2439
    %v2548 = vpack.c.b16 %v2446, %v2440
    %v2549 = vpack.c.b16 %v2447, %v2441
    %v2550 = vpack.c.b16 %v2448, %v2442
    %v2551 = vpack.c.b16 %v2449, %v2443
    %v2552 = vpack.c.b16 %v2456, %v2450
    %v2553 = vpack.c.b16 %v2457, %v2451
    %v2554 = vpack.c.b16 %v2458, %v2452
    %v2555 = vpack.c.b16 %v2459, %v2453
    %v2556 = vpack.c.b16 %v2460, %v2454
    %v2557 = vpack.c.b16 %v2461, %v2455
    %2654 = vmatprep.subr.bf16.mxu0 %v2463
    %2655 = vmatpush1.bf16.msra.mxu0 %v2462
    %2656 = vmatprep.subr.bf16.mxu0 %v2469
    %2657 = vmatpush1.bf16.msra.mxu0 %v2468
    %2658 = vmatprep.subr.bf16.mxu0 %v2475
    %2659 = vmatpush1.bf16.msra.mxu0 %v2474
    %2660 = vmatprep.subr.bf16.mxu0 %v2481
    %2661 = vmatpush1.bf16.msra.mxu0 %v2480
    %2662 = vmatprep.subr.bf16.mxu0 %v2487
    %2663 = vmatpush1.bf16.msra.mxu0 %v2486
    %2664 = vmatprep.subr.bf16.mxu0 %v2493
    %2665 = vmatpush1.bf16.msra.mxu0 %v2492
    %2666 = vmatprep.subr.bf16.mxu0 %v2499
    %2667 = vmatpush1.bf16.msra.mxu0 %v2498
    %2668 = vmatprep.subr.bf16.mxu0 %v2505
    %2669 = vmatpush1.bf16.msra.mxu0 %v2504
    %2670 = vmatprep.subr.bf16.mxu0 %v2511
    %2671 = vmatpush1.bf16.msra.mxu0 %v2510
    %2672 = vmatprep.subr.bf16.mxu0 %v2517
    %2673 = vmatpush1.bf16.msra.mxu0 %v2516
    %2674 = vmatprep.subr.bf16.mxu0 %v2523
    %2675 = vmatpush1.bf16.msra.mxu0 %v2522
    %2676 = vmatprep.subr.bf16.mxu0 %v2529
    %2677 = vmatpush1.bf16.msra.mxu0 %v2528
    %2678 = vmatprep.subr.bf16.mxu0 %v2535
    %2679 = vmatpush1.bf16.msra.mxu0 %v2534
    %2680 = vmatprep.subr.bf16.mxu0 %v2541
    %2681 = vmatpush1.bf16.msra.mxu0 %v2540
    %2682 = vmatprep.subr.bf16.mxu0 %v2547
    %2683 = vmatpush1.bf16.msra.mxu0 %v2546
    %2684 = vmatprep.subr.bf16.mxu0 %v2553
    %2685 = vmatpush1.bf16.msra.mxu0 %v2552
    %2686 = vmatprep.mubr.bf16.mxu0 %v2045
    %2687 = vmatmul.mubr.bf16.gmra.mrb[0].mxu0 %v2044
    %v2688 = vpop.f32.mrb[0].mxu0
    %v2689 = vadd.f32 %v2147, %v2688
    %v2690 = vpop.f32.mrb[0].mxu0
    %v2691 = vadd.f32 %v2151, %v2690
    %v2692 = vpop.f32.mrb[0].mxu0
    %v2693 = vadd.f32 %v2147, %v2692
    %v2694 = vpop.f32.mrb[0].mxu0
    %v2695 = vadd.f32 %v2151, %v2694
    %2696 = vdwg.mxu0
    %2697 = vmatprep.subr.bf16.mxu0 %v2465
    %2698 = vmatpush1.bf16.msra.mxu0 %v2464
    %2699 = vmatprep.subr.bf16.mxu0 %v2471
    %2700 = vmatpush1.bf16.msra.mxu0 %v2470
    %2701 = vmatprep.subr.bf16.mxu0 %v2477
    %2702 = vmatpush1.bf16.msra.mxu0 %v2476
    %2703 = vmatprep.subr.bf16.mxu0 %v2483
    %2704 = vmatpush1.bf16.msra.mxu0 %v2482
    %2705 = vmatprep.subr.bf16.mxu0 %v2489
    %2706 = vmatpush1.bf16.msra.mxu0 %v2488
    %2707 = vmatprep.subr.bf16.mxu0 %v2495
    %2708 = vmatpush1.bf16.msra.mxu0 %v2494
    %2709 = vmatprep.subr.bf16.mxu0 %v2501
    %2710 = vmatpush1.bf16.msra.mxu0 %v2500
    %2711 = vmatprep.subr.bf16.mxu0 %v2507
    %2712 = vmatpush1.bf16.msra.mxu0 %v2506
    %2713 = vmatprep.subr.bf16.mxu0 %v2513
    %2714 = vmatpush1.bf16.msra.mxu0 %v2512
    %2715 = vmatprep.subr.bf16.mxu0 %v2519
    %2716 = vmatpush1.bf16.msra.mxu0 %v2518
    %2717 = vmatprep.subr.bf16.mxu0 %v2525
    %2718 = vmatpush1.bf16.msra.mxu0 %v2524
    %2719 = vmatprep.subr.bf16.mxu0 %v2531
    %2720 = vmatpush1.bf16.msra.mxu0 %v2530
    %2721 = vmatprep.subr.bf16.mxu0 %v2537
    %2722 = vmatpush1.bf16.msra.mxu0 %v2536
    %2723 = vmatprep.subr.bf16.mxu0 %v2543
    %2724 = vmatpush1.bf16.msra.mxu0 %v2542
    %2725 = vmatprep.subr.bf16.mxu0 %v2549
    %2726 = vmatpush1.bf16.msra.mxu0 %v2548
    %2727 = vmatprep.subr.bf16.mxu0 %v2555
    %2728 = vmatpush1.bf16.msra.mxu0 %v2554
    %2729 = vmatprep.mubr.bf16.mxu0 %v2045
    %2730 = vmatmul.mubr.bf16.gmra.mrb[0].mxu0 %v2044
    %v2731 = vpop.f32.mrb[0].mxu0
    %v2732 = vadd.f32 %v2155, %v2731
    %v2733 = vpop.f32.mrb[0].mxu0
    %v2734 = vadd.f32 %v2159, %v2733
    %v2735 = vpop.f32.mrb[0].mxu0
    %v2736 = vadd.f32 %v2155, %v2735
    %v2737 = vpop.f32.mrb[0].mxu0
    %v2738 = vadd.f32 %v2159, %v2737
    %2739 = vdwg.mxu0
    %2740 = vmatprep.subr.bf16.mxu0 %v2467
    %2741 = vmatpush1.bf16.msra.mxu0 %v2466
    %2742 = vmatprep.subr.bf16.mxu0 %v2473
    %2743 = vmatpush1.bf16.msra.mxu0 %v2472
    %2744 = vmatprep.subr.bf16.mxu0 %v2479
    %2745 = vmatpush1.bf16.msra.mxu0 %v2478
    %2746 = vmatprep.subr.bf16.mxu0 %v2485
    %2747 = vmatpush1.bf16.msra.mxu0 %v2484
    %2748 = vmatprep.subr.bf16.mxu0 %v2491
    %2749 = vmatpush1.bf16.msra.mxu0 %v2490
    %2750 = vmatprep.subr.bf16.mxu0 %v2497
    %2751 = vmatpush1.bf16.msra.mxu0 %v2496
    %2752 = vmatprep.subr.bf16.mxu0 %v2503
    %2753 = vmatpush1.bf16.msra.mxu0 %v2502
    %2754 = vmatprep.subr.bf16.mxu0 %v2509
    %2755 = vmatpush1.bf16.msra.mxu0 %v2508
    %2756 = vmatprep.subr.bf16.mxu0 %v2515
    %2757 = vmatpush1.bf16.msra.mxu0 %v2514
    %2758 = vmatprep.subr.bf16.mxu0 %v2521
    %2759 = vmatpush1.bf16.msra.mxu0 %v2520
    %2760 = vmatprep.subr.bf16.mxu0 %v2527
    %2761 = vmatpush1.bf16.msra.mxu0 %v2526
    %2762 = vmatprep.subr.bf16.mxu0 %v2533
    %2763 = vmatpush1.bf16.msra.mxu0 %v2532
    %2764 = vmatprep.subr.bf16.mxu0 %v2539
    %2765 = vmatpush1.bf16.msra.mxu0 %v2538
    %2766 = vmatprep.subr.bf16.mxu0 %v2545
    %2767 = vmatpush1.bf16.msra.mxu0 %v2544
    %2768 = vmatprep.subr.bf16.mxu0 %v2551
    %2769 = vmatpush1.bf16.msra.mxu0 %v2550
    %2770 = vmatprep.subr.bf16.mxu0 %v2557
    %2771 = vmatpush1.bf16.msra.mxu0 %v2556
    %2772 = vmatprep.mubr.bf16.mxu0 %v2045
    %2773 = vmatmul.mubr.bf16.gmra.mrb[0].mxu0 %v2044
    %v2774 = vpop.f32.mrb[0].mxu0
    %v2775 = vadd.f32 %v2163, %v2774
    %v2776 = vpop.f32.mrb[0].mxu0
    %v2777 = vadd.f32 %v2167, %v2776
    %v2778 = vpop.f32.mrb[0].mxu0
    %v2779 = vadd.f32 %v2163, %v2778
    %v2780 = vpop.f32.mrb[0].mxu0
    %v2781 = vadd.f32 %v2167, %v2780
    %2782 = vdwg.mxu0
    %2783 = vst [vmem:[#allocation14] sm:$0xff] %v2689
    %2784 = vst [vmem:[#allocation14 + $0x8] sm:$0xff] %v2691
    %2785 = vst [vmem:[#allocation14 + $0x10] sm:$0xff] %v2732
    %2786 = vst [vmem:[#allocation14 + $0x18] sm:$0xff] %v2734
    %2787 = vst [vmem:[#allocation14 + $0x20] sm:$0xff] %v2775
    %2788 = vst [vmem:[#allocation14 + $0x28] sm:$0xff] %v2777
    %2789 = vst [vmem:[#allocation14 + $0x30] sm:$0xff] %v2693
    %2790 = vst [vmem:[#allocation14 + $0x38] sm:$0xff] %v2695
    %2791 = vst [vmem:[#allocation14 + $0x40] sm:$0xff] %v2736
    %2792 = vst [vmem:[#allocation14 + $0x48] sm:$0xff] %v2738
    %2793 = vst [vmem:[#allocation14 + $0x50] sm:$0xff] %v2779
    %2794 = vst [vmem:[#allocation14 + $0x58] sm:$0xff] %v2781
    // Predicated region
    $region90: #{tpu_custom_call.1} parent=1 // pred_check
      _
    $region91: #{tpu_custom_call.1} parent=1 // pred_check_branch
      %2796 = sbr.rel (0) target = $region93
    $region92: #{tpu_custom_call.1} parent=1 // pred_region
      %s2798 = ssub.s32 1536, 1536
      %2799 = vsyncadd [#allocation4], %s2798
      %s2800 = sshll.u32 [#allocation14], 4
      %s2801 = int_to_ptr.vmem [resolvable:$true] %s2800
      %2806 = dma.vmem_to_hbm [thread:$0]  %s2801, 1536, %s15, [#allocation4], 768, 768, 48
    $region93: #{tpu_custom_call.1} parent=1 // pred_fallthru
      _
    // Predicated region
    $region94: #{tpu_custom_call.1} parent=1 // pred_check
      _
    $region95: #{tpu_custom_call.1} parent=1 // pred_check_branch
      %2808 = sbr.rel (0) target = $region97
    $region96: #{tpu_custom_call.1} parent=1 // pred_region
      %2809 = dma.done [#allocation4], 1536
    $region97: #{tpu_custom_call.1} parent=1 // pred_fallthru
      _
    %2810 = vsyncpa [#allocation3], 1
    %2811 = vsyncpa [#allocation6], 1
    %2812 = vsyncpa [#allocation9], 1
    %2813 = vsyncpa [#allocation12], 1
    %2814 = vsyncpa [#allocation4], 1

</llo_original>
